<compile_context>
chip_gen: v6e
topology: v6e:2x2x1
jax: 0.10.0
libtpu: 0.0.40
codegen_flags: <defaults>
</compile_context>

<pallas_src>
import functools

import jax
import jax.numpy as jnp
from jax import lax
from jax.experimental import pallas as pl
from jax.experimental.pallas import tpu as pltpu


def _round_up(x, m):
    return ((x + m - 1) // m) * m


def latent_encoder_kernel(ctx_ref,                    # (Din+1, T) context^T tile (+ ones row)
                          w0_ref,                     # (H0, Din+1)  bias folded in
                          w1_ref, b1_ref, w2_ref, b2_ref,
                          wp_ref, bp_ref, wm_ref, bm_ref, ws_ref, bs_ref,
                          out_ref,                    # (L, 2): col 0 = mu, col 1 = sigma
                          acc_ref,                    # (L, T) f32 running sum of z
                          *, n_points, needs_mask):
    """Per-tile encoder MLP + running sum; mean + heads on the last step."""
    step = pl.program_id(0)
    last = pl.num_programs(0) - 1

    @pl.when(step == 0)
    def _():
        acc_ref[...] = jnp.zeros_like(acc_ref)

    x = ctx_ref[...]                                                       # (Din+1, T)

    # Per-point encoder MLP in the lane-dense (features x points) layout.
    h = jnp.maximum(
        jnp.dot(w0_ref[...], x, preferred_element_type=jnp.float32), 0.0)  # (H0, T)
    h = jnp.maximum(
        jnp.dot(w1_ref[...], h, preferred_element_type=jnp.float32) + b1_ref[...], 0.0)
    z = jnp.dot(w2_ref[...], h, preferred_element_type=jnp.float32) + b2_ref[...]   # (L, T)

    if needs_mask:
        # Only the final tile has padded columns; mask them there, plain add elsewhere.
        t = z.shape[-1]

        @pl.when(step == last)
        def _():
            col = step * t + lax.broadcasted_iota(jnp.int32, z.shape, 1)
            acc_ref[...] += jnp.where(col < n_points, z, 0.0)

        @pl.when(step != last)
        def _():
            acc_ref[...] += z
    else:
        acc_ref[...] += z

    @pl.when(step == last)
    def _():
        # Single cross-lane reduce, then the tiny heads.
        zc = jnp.sum(acc_ref[...], axis=1, keepdims=True) * (1.0 / n_points)      # (L, 1)
        common = jnp.maximum(
            jnp.dot(wp_ref[...], zc, preferred_element_type=jnp.float32) + bp_ref[...], 0.0)
        mu = jnp.dot(wm_ref[...], common, preferred_element_type=jnp.float32) + bm_ref[...]
        s = jnp.dot(ws_ref[...], common, preferred_element_type=jnp.float32) + bs_ref[...]
        sigma = 0.1 + 0.9 * jax.nn.sigmoid(s)
        out_ref[...] = jnp.concatenate([mu, sigma], axis=1).astype(out_ref.dtype)


def latent_encoder_forward(x_context, y_context, params, *, max_point_tile=2048):
    """x_context: (N, dx), y_context: (N, dy).  Returns (mu, sigma), each (L,)."""
    (w0, b0, w1, b1, w2, b2, wp, bp, wm, bm, ws, bs) = params

    n, dx = x_context.shape
    dy = y_context.shape[1]
    din = dx + dy
    latent = wm.shape[0]

    # Lane-dense tiling: points on the 128-wide lane axis.  Single grid step
    # when the whole problem fits; otherwise multi-step with tiles that are a
    # multiple of 512.  VMEM is never the constraint here (<1 MiB working set).
    if n <= max_point_tile:
        point_tile = max(512, _round_up(n, 512))
    else:
        point_tile = _round_up(max_point_tile, 512)
    grid_len = int(pl.cdiv(n, point_tile))
    n_pad = grid_len * point_tile
    needs_mask = (n_pad != n)

    # (Din+1, n_pad): context^T with a trailing row of ones so layer-0's bias
    # folds into the first matmul.  The concat/transpose/pad fuse into a single
    # XLA copy in the wrapper.
    ctx_t = jnp.concatenate(
        [x_context.astype(jnp.float32).T,
         y_context.astype(jnp.float32).T,
         jnp.ones((1, n), jnp.float32)], axis=0)
    ctx_t = jnp.pad(ctx_t, ((0, 0), (0, n_pad - n)))

    w0_aug = jnp.concatenate([w0, b0], axis=1)                             # (H0, Din+1)

    const = lambda i: (0, 0)
    kernel = functools.partial(latent_encoder_kernel,
                               n_points=int(n), needs_mask=needs_mask)

    out = pl.pallas_call(
        kernel,
        out_shape=jax.ShapeDtypeStruct((latent, 2), jnp.float32),
        grid_spec=pltpu.PrefetchScalarGridSpec(
            num_scalar_prefetch=0,
            grid=(grid_len,),
            in_specs=[
                pl.BlockSpec((din + 1, point_tile), lambda i: (0, i)),     # context^T tile
                pl.BlockSpec(w0_aug.shape, const),
                pl.BlockSpec(w1.shape, const), pl.BlockSpec(b1.shape, const),
                pl.BlockSpec(w2.shape, const), pl.BlockSpec(b2.shape, const),
                pl.BlockSpec(wp.shape, const), pl.BlockSpec(bp.shape, const),
                pl.BlockSpec(wm.shape, const), pl.BlockSpec(bm.shape, const),
                pl.BlockSpec(ws.shape, const), pl.BlockSpec(bs.shape, const),
            ],
            out_specs=pl.BlockSpec((latent, 2), const),
            scratch_shapes=[pltpu.VMEM((latent, point_tile), jnp.float32)],
        ),
        compiler_params=pltpu.CompilerParams(
            # The single grid axis is the mean-reduction over context points.
            dimension_semantics=("arbitrary",)),
    )(ctx_t, w0_aug, w1, b1, w2, b2, wp, bp, wm, bm, ws, bs)

    # TODO(synk): torch.distributions.Normal has no Pallas equivalent; the
    # distribution is fully parameterized by the (mu, sigma) returned here.
    return out[:, 0], out[:, 1]


def init_latent_encoder_params(key, input_size, latent_size, hidden_size):
    """Torch-style shapes: W stored as (out, in), b as (out, 1)."""
    layer_dims = ([(input_size, hidden_size[0])]
                  + [(hidden_size[i], hidden_size[i + 1])
                     for i in range(len(hidden_size) - 1)]
                  + [(hidden_size[-1], latent_size)]
                  + [(latent_size, latent_size)] * 3)   # penultimate, mean, sigma
    params = []
    for fan_in, fan_out in layer_dims:
        key, kw, kb = jax.random.split(key, 3)
        bound = 1.0 / float(fan_in) ** 0.5
        w = jax.random.uniform(kw, (fan_out, fan_in), jnp.float32, -bound, bound)
        b = jax.random.uniform(kb, (fan_out, 1), jnp.float32, -bound, bound)
        params += [w, b]
    return tuple(params)


def latent_encoder_reference(x_context, y_context, params):
    """Pure-JAX reference mirroring the PyTorch forward."""
    w0, b0, w1, b1, w2, b2, wp, bp, wm, bm, ws, bs = params
    ctx = jnp.concatenate([x_context, y_context], axis=-1)
    h = jnp.maximum(ctx @ w0.T + b0[:, 0], 0.0)
    h = jnp.maximum(h @ w1.T + b1[:, 0], 0.0)
    z = h @ w2.T + b2[:, 0]
    zc = jnp.mean(z, axis=0)
    common = jnp.maximum(zc @ wp.T + bp[:, 0], 0.0)
    mu = common @ wm.T + bm[:, 0]
    sigma = 0.1 + 0.9 * jax.nn.sigmoid(common @ ws.T + bs[:, 0])
    return mu, sigma


if __name__ == "__main__":
    # Small shapes consistent with the module; N deliberately NOT a tile multiple,
    # so both the single-step path and the static tail-mask are exercised.
    num_points = 1000
    x_dim, y_dim = 3, 1
    input_size = x_dim + y_dim
    hidden_size = [32, 32]
    latent_size = 8

    key = jax.random.PRNGKey(0)
    key, kx, ky = jax.random.split(key, 3)
    x_context = jax.random.normal(kx, (num_points, x_dim), jnp.float32)
    y_context = jax.random.normal(ky, (num_points, y_dim), jnp.float32)

    params = init_latent_encoder_params(key, input_size, latent_size, hidden_size)

    fwd = jax.jit(latent_encoder_forward)     # N=1000 -> one 1024-wide grid step
    mu, sigma = fwd(x_context, y_context, params)
    jax.block_until_ready((mu, sigma))

    mu_ref, sigma_ref = latent_encoder_reference(x_context, y_context, params)
    assert mu.shape == (latent_size,)
    assert sigma.shape == (latent_size,)
    assert jnp.allclose(mu, mu_ref, atol=1e-4, rtol=1e-4)
    assert jnp.allclose(sigma, sigma_ref, atol=1e-4, rtol=1e-4)
    assert bool(jnp.all(sigma > 0.1))   # Normal(loc=mu, scale=sigma) is well-defined.

    # Also exercise the multi-step (tiled) reduction path with the tail mask.
    fwd_tiled = jax.jit(functools.partial(latent_encoder_forward, max_point_tile=512))
    mu2, sigma2 = fwd_tiled(x_context, y_context, params)
    jax.block_until_ready((mu2, sigma2))
    assert jnp.allclose(mu2, mu_ref, atol=1e-4, rtol=1e-4)
    assert jnp.allclose(sigma2, sigma_ref, atol=1e-4, rtol=1e-4)

    print("KERNEL_OK")
</pallas_src>

<mosaic_0001>
module attributes {stable_mosaic.version = 11 : i64} {
  func.func @latent_encoder_kernel(%arg0: i32, %arg1: memref<5x1024xf32, #tpu.memory_space<vmem>>, %arg2: memref<32x5xf32, #tpu.memory_space<vmem>>, %arg3: memref<32x32xf32, #tpu.memory_space<vmem>>, %arg4: memref<32x1xf32, #tpu.memory_space<vmem>>, %arg5: memref<8x32xf32, #tpu.memory_space<vmem>>, %arg6: memref<8x1xf32, #tpu.memory_space<vmem>>, %arg7: memref<8x8xf32, #tpu.memory_space<vmem>>, %arg8: memref<8x1xf32, #tpu.memory_space<vmem>>, %arg9: memref<8x8xf32, #tpu.memory_space<vmem>>, %arg10: memref<8x1xf32, #tpu.memory_space<vmem>>, %arg11: memref<8x8xf32, #tpu.memory_space<vmem>>, %arg12: memref<8x1xf32, #tpu.memory_space<vmem>>, %arg13: memref<8x2xf32, #tpu.memory_space<vmem>>, %arg14: memref<8x1024xf32, #tpu.memory_space<vmem>>) attributes {dimension_semantics = [#tpu.dimension_semantics<arbitrary>], iteration_bounds = array<i64: 1>, scalar_prefetch = 0 : i64, scratch_operands = 1 : i64, tpu.core_type = #tpu.core_type<tc>, window_params = [{transform_indices = @transform_0, window_bounds = array<i64: 5, 1024>}, {pipeline_mode = #tpu.pipeline_mode<synchronous>, transform_indices = @transform_1, window_bounds = array<i64: 32, 5>}, {pipeline_mode = #tpu.pipeline_mode<synchronous>, transform_indices = @transform_2, window_bounds = array<i64: 32, 32>}, {pipeline_mode = #tpu.pipeline_mode<synchronous>, transform_indices = @transform_3, window_bounds = array<i64: 32, 1>}, {pipeline_mode = #tpu.pipeline_mode<synchronous>, transform_indices = @transform_4, window_bounds = array<i64: 8, 32>}, {pipeline_mode = #tpu.pipeline_mode<synchronous>, transform_indices = @transform_5, window_bounds = array<i64: 8, 1>}, {pipeline_mode = #tpu.pipeline_mode<synchronous>, transform_indices = @transform_6, window_bounds = array<i64: 8, 8>}, {pipeline_mode = #tpu.pipeline_mode<synchronous>, transform_indices = @transform_7, window_bounds = array<i64: 8, 1>}, {pipeline_mode = #tpu.pipeline_mode<synchronous>, transform_indices = @transform_8, window_bounds = array<i64: 8, 8>}, {pipeline_mode = #tpu.pipeline_mode<synchronous>, transform_indices = @transform_9, window_bounds = array<i64: 8, 1>}, {pipeline_mode = #tpu.pipeline_mode<synchronous>, transform_indices = @transform_10, window_bounds = array<i64: 8, 8>}, {pipeline_mode = #tpu.pipeline_mode<synchronous>, transform_indices = @transform_11, window_bounds = array<i64: 8, 1>}, {pipeline_mode = #tpu.pipeline_mode<synchronous>, transform_indices = @transform_12, window_bounds = array<i64: 8, 2>}]} {
    %c0_i32 = arith.constant 0 : i32
    %0 = arith.cmpi eq, %arg0, %c0_i32 : i32
    %1 = arith.extui %0 : i1 to i32
    %c0_i32_0 = arith.constant 0 : i32
    %2 = arith.cmpi ne, %1, %c0_i32_0 : i32
    scf.if %2 {
      %cst_22 = arith.constant 0.000000e+00 : f32
      %29 = vector.broadcast %cst_22 : f32 to vector<8x1024xf32>
      %c0_23 = arith.constant 0 : index
      %c0_24 = arith.constant 0 : index
      %30 = vector.load %arg14[%c0_23, %c0_24] : memref<8x1024xf32, #tpu.memory_space<vmem>>, vector<8x1024xf32>
      tpu.vector_store %arg14[%c0_23, %c0_24], %29 {strides = array<i32>} : memref<8x1024xf32, #tpu.memory_space<vmem>>, vector<8x1024xf32>,
    } else {
    }
    %c0 = arith.constant 0 : index
    %c0_1 = arith.constant 0 : index
    %3 = vector.load %arg1[%c0, %c0_1] : memref<5x1024xf32, #tpu.memory_space<vmem>>, vector<5x1024xf32>
    %c0_2 = arith.constant 0 : index
    %c0_3 = arith.constant 0 : index
    %4 = vector.load %arg2[%c0_2, %c0_3] : memref<32x5xf32, #tpu.memory_space<vmem>>, vector<32x5xf32>
    %cst = arith.constant dense<0.000000e+00> : vector<32x1024xf32>
    %5 = tpu.matmul %4, %3, %cst {dimension_numbers = #tpu.dot_dimension_numbers<[1], [0], [0], [1], [0, 0, 1, 1], [], []>} : vector<32x5xf32>, vector<5x1024xf32>, vector<32x1024xf32> -> vector<32x1024xf32>
    %cst_4 = arith.constant 0.000000e+00 : f32
    %6 = vector.broadcast %cst_4 : f32 to vector<32x1024xf32>
    %7 = arith.maximumf %5, %6 : vector<32x1024xf32>
    %c0_5 = arith.constant 0 : index
    %c0_6 = arith.constant 0 : index
    %8 = vector.load %arg3[%c0_5, %c0_6] : memref<32x32xf32, #tpu.memory_space<vmem>>, vector<32x32xf32>
    %cst_7 = arith.constant dense<0.000000e+00> : vector<32x1024xf32>
    %9 = tpu.matmul %8, %7, %cst_7 {dimension_numbers = #tpu.dot_dimension_numbers<[1], [0], [0], [1], [0, 0, 1, 1], [], []>} : vector<32x32xf32>, vector<32x1024xf32>, vector<32x1024xf32> -> vector<32x1024xf32>
    %c0_8 = arith.constant 0 : index
    %c0_9 = arith.constant 0 : index
    %10 = vector.load %arg4[%c0_8, %c0_9] : memref<32x1xf32, #tpu.memory_space<vmem>>, vector<32x1xf32>
    %11 = vector.broadcast %10 : vector<32x1xf32> to vector<32x1024xf32>
    %12 = arith.addf %9, %11 : vector<32x1024xf32>
    %cst_10 = arith.constant 0.000000e+00 : f32
    %13 = vector.broadcast %cst_10 : f32 to vector<32x1024xf32>
    %14 = arith.maximumf %12, %13 : vector<32x1024xf32>
    %c0_11 = arith.constant 0 : index
    %c0_12 = arith.constant 0 : index
    %15 = vector.load %arg5[%c0_11, %c0_12] : memref<8x32xf32, #tpu.memory_space<vmem>>, vector<8x32xf32>
    %cst_13 = arith.constant dense<0.000000e+00> : vector<8x1024xf32>
    %16 = tpu.matmul %15, %14, %cst_13 {dimension_numbers = #tpu.dot_dimension_numbers<[1], [0], [0], [1], [0, 0, 1, 1], [], []>} : vector<8x32xf32>, vector<32x1024xf32>, vector<8x1024xf32> -> vector<8x1024xf32>
    %c0_14 = arith.constant 0 : index
    %c0_15 = arith.constant 0 : index
    %17 = vector.load %arg6[%c0_14, %c0_15] : memref<8x1xf32, #tpu.memory_space<vmem>>, vector<8x1xf32>
    %18 = vector.broadcast %17 : vector<8x1xf32> to vector<8x1024xf32>
    %19 = arith.addf %16, %18 : vector<8x1024xf32>
    %c0_i32_16 = arith.constant 0 : i32
    %20 = arith.cmpi eq, %arg0, %c0_i32_16 : i32
    %21 = arith.extui %20 : i1 to i32
    %c0_i32_17 = arith.constant 0 : i32
    %22 = arith.cmpi ne, %21, %c0_i32_17 : i32
    scf.if %22 {
      %c1024_i32 = arith.constant 1024 : i32
      %29 = arith.muli %arg0, %c1024_i32 : i32
      %30 = tpu.iota {dimensions = array<i32: 1>} : vector<8x1024xi32>
      %31 = vector.broadcast %29 : i32 to vector<8x1024xi32>
      %32 = arith.addi %31, %30 : vector<8x1024xi32>
      %c0_22 = arith.constant 0 : index
      %c0_23 = arith.constant 0 : index
      %33 = vector.load %arg14[%c0_22, %c0_23] : memref<8x1024xf32, #tpu.memory_space<vmem>>, vector<8x1024xf32>
      %c1000_i32 = arith.constant 1000 : i32
      %34 = vector.broadcast %c1000_i32 : i32 to vector<8x1024xi32>
      %35 = arith.cmpi slt, %32, %34 : vector<8x1024xi32>
      %cst_24 = arith.constant 0.000000e+00 : f32
      %36 = vector.broadcast %cst_24 : f32 to vector<8x1024xf32>
      %37 = arith.select %35, %19, %36 : vector<8x1024xi1>, vector<8x1024xf32>
      %38 = arith.addf %33, %37 : vector<8x1024xf32>
      %c0_25 = arith.constant 0 : index
      %c0_26 = arith.constant 0 : index
      %39 = vector.load %arg14[%c0_25, %c0_26] : memref<8x1024xf32, #tpu.memory_space<vmem>>, vector<8x1024xf32>
      tpu.vector_store %arg14[%c0_25, %c0_26], %38 {strides = array<i32>} : memref<8x1024xf32, #tpu.memory_space<vmem>>, vector<8x1024xf32>,
    } else {
    }
    %c0_i32_18 = arith.constant 0 : i32
    %23 = arith.cmpi ne, %arg0, %c0_i32_18 : i32
    %24 = arith.extui %23 : i1 to i32
    %c0_i32_19 = arith.constant 0 : i32
    %25 = arith.cmpi ne, %24, %c0_i32_19 : i32
    scf.if %25 {
      %c0_22 = arith.constant 0 : index
      %c0_23 = arith.constant 0 : index
      %29 = vector.load %arg14[%c0_22, %c0_23] : memref<8x1024xf32, #tpu.memory_space<vmem>>, vector<8x1024xf32>
      %30 = arith.addf %29, %19 : vector<8x1024xf32>
      %c0_24 = arith.constant 0 : index
      %c0_25 = arith.constant 0 : index
      %31 = vector.load %arg14[%c0_24, %c0_25] : memref<8x1024xf32, #tpu.memory_space<vmem>>, vector<8x1024xf32>
      tpu.vector_store %arg14[%c0_24, %c0_25], %30 {strides = array<i32>} : memref<8x1024xf32, #tpu.memory_space<vmem>>, vector<8x1024xf32>,
    } else {
    }
    %c0_i32_20 = arith.constant 0 : i32
    %26 = arith.cmpi eq, %arg0, %c0_i32_20 : i32
    %27 = arith.extui %26 : i1 to i32
    %c0_i32_21 = arith.constant 0 : i32
    %28 = arith.cmpi ne, %27, %c0_i32_21 : i32
    scf.if %28 {
      %c0_22 = arith.constant 0 : index
      %c0_23 = arith.constant 0 : index
      %29 = vector.load %arg14[%c0_22, %c0_23] : memref<8x1024xf32, #tpu.memory_space<vmem>>, vector<8x1024xf32>
      %cst_24 = arith.constant dense<0.000000e+00> : vector<8xf32>
      %30 = vector.multi_reduction <add>, %29, %cst_24 [1] : vector<8x1024xf32> to vector<8xf32>
      %31 = vector.shape_cast %30 : vector<8xf32> to vector<8x1xf32>
      %cst_25 = arith.constant 1.000000e-03 : f32
      %32 = vector.broadcast %cst_25 : f32 to vector<8x1xf32>
      %33 = arith.mulf %31, %32 : vector<8x1xf32>
      %c0_26 = arith.constant 0 : index
      %c0_27 = arith.constant 0 : index
      %34 = vector.load %arg7[%c0_26, %c0_27] : memref<8x8xf32, #tpu.memory_space<vmem>>, vector<8x8xf32>
      %cst_28 = arith.constant dense<0.000000e+00> : vector<8x1xf32>
      %35 = tpu.matmul %34, %33, %cst_28 {dimension_numbers = #tpu.dot_dimension_numbers<[1], [0], [0], [1], [0, 0, 1, 1], [], []>} : vector<8x8xf32>, vector<8x1xf32>, vector<8x1xf32> -> vector<8x1xf32>
      %c0_29 = arith.constant 0 : index
      %c0_30 = arith.constant 0 : index
      %36 = vector.load %arg8[%c0_29, %c0_30] : memref<8x1xf32, #tpu.memory_space<vmem>>, vector<8x1xf32>
      %37 = arith.addf %35, %36 : vector<8x1xf32>
      %cst_31 = arith.constant 0.000000e+00 : f32
      %38 = vector.broadcast %cst_31 : f32 to vector<8x1xf32>
      %39 = arith.maximumf %37, %38 : vector<8x1xf32>
      %c0_32 = arith.constant 0 : index
      %c0_33 = arith.constant 0 : index
      %40 = vector.load %arg9[%c0_32, %c0_33] : memref<8x8xf32, #tpu.memory_space<vmem>>, vector<8x8xf32>
      %cst_34 = arith.constant dense<0.000000e+00> : vector<8x1xf32>
      %41 = tpu.matmul %40, %39, %cst_34 {dimension_numbers = #tpu.dot_dimension_numbers<[1], [0], [0], [1], [0, 0, 1, 1], [], []>} : vector<8x8xf32>, vector<8x1xf32>, vector<8x1xf32> -> vector<8x1xf32>
      %c0_35 = arith.constant 0 : index
      %c0_36 = arith.constant 0 : index
      %42 = vector.load %arg10[%c0_35, %c0_36] : memref<8x1xf32, #tpu.memory_space<vmem>>, vector<8x1xf32>
      %43 = arith.addf %41, %42 : vector<8x1xf32>
      %c0_37 = arith.constant 0 : index
      %c0_38 = arith.constant 0 : index
      %44 = vector.load %arg11[%c0_37, %c0_38] : memref<8x8xf32, #tpu.memory_space<vmem>>, vector<8x8xf32>
      %cst_39 = arith.constant dense<0.000000e+00> : vector<8x1xf32>
      %45 = tpu.matmul %44, %39, %cst_39 {dimension_numbers = #tpu.dot_dimension_numbers<[1], [0], [0], [1], [0, 0, 1, 1], [], []>} : vector<8x8xf32>, vector<8x1xf32>, vector<8x1xf32> -> vector<8x1xf32>
      %c0_40 = arith.constant 0 : index
      %c0_41 = arith.constant 0 : index
      %46 = vector.load %arg12[%c0_40, %c0_41] : memref<8x1xf32, #tpu.memory_space<vmem>>, vector<8x1xf32>
      %47 = arith.addf %45, %46 : vector<8x1xf32>
      %48 = arith.negf %47 : vector<8x1xf32>
      %49 = math.exp %48 : vector<8x1xf32>
      %cst_42 = arith.constant 1.000000e+00 : f32
      %50 = vector.broadcast %cst_42 : f32 to vector<8x1xf32>
      %51 = arith.addf %50, %49 : vector<8x1xf32>
      %52 = arith.divf %50, %51 : vector<8x1xf32>
      %cst_43 = arith.constant 0.899999976 : f32
      %53 = vector.broadcast %cst_43 : f32 to vector<8x1xf32>
      %54 = arith.mulf %53, %52 : vector<8x1xf32>
      %cst_44 = arith.constant 1.000000e-01 : f32
      %55 = vector.broadcast %cst_44 : f32 to vector<8x1xf32>
      %56 = arith.addf %55, %54 : vector<8x1xf32>
      %57 = tpu.concatenate %43, %56 in 1 : vector<8x1xf32>, vector<8x1xf32> -> vector<8x2xf32>
      %c0_45 = arith.constant 0 : index
      %c0_46 = arith.constant 0 : index
      %58 = vector.load %arg13[%c0_45, %c0_46] : memref<8x2xf32, #tpu.memory_space<vmem>>, vector<8x2xf32>
      tpu.vector_store %arg13[%c0_45, %c0_46], %57 {strides = array<i32>} : memref<8x2xf32, #tpu.memory_space<vmem>>, vector<8x2xf32>,
    } else {
    }
    return
  }
  func.func @transform_0(%arg0: i32) -> (i32, i32) {
    %c0_i32 = arith.constant 0 : i32
    %c0_i32_0 = arith.constant 0 : i32
    return %c0_i32, %arg0 : i32, i32
  }
  func.func @transform_1(%arg0: i32) -> (i32, i32) {
    %c0_i32 = arith.constant 0 : i32
    %c0_i32_0 = arith.constant 0 : i32
    %c0_i32_1 = arith.constant 0 : i32
    return %c0_i32, %c0_i32_0 : i32, i32
  }
  func.func @transform_2(%arg0: i32) -> (i32, i32) {
    %c0_i32 = arith.constant 0 : i32
    %c0_i32_0 = arith.constant 0 : i32
    %c0_i32_1 = arith.constant 0 : i32
    return %c0_i32, %c0_i32_0 : i32, i32
  }
  func.func @transform_3(%arg0: i32) -> (i32, i32) {
    %c0_i32 = arith.constant 0 : i32
    %c0_i32_0 = arith.constant 0 : i32
    %c0_i32_1 = arith.constant 0 : i32
    return %c0_i32, %c0_i32_0 : i32, i32
  }
  func.func @transform_4(%arg0: i32) -> (i32, i32) {
    %c0_i32 = arith.constant 0 : i32
    %c0_i32_0 = arith.constant 0 : i32
    %c0_i32_1 = arith.constant 0 : i32
    return %c0_i32, %c0_i32_0 : i32, i32
  }
  func.func @transform_5(%arg0: i32) -> (i32, i32) {
    %c0_i32 = arith.constant 0 : i32
    %c0_i32_0 = arith.constant 0 : i32
    %c0_i32_1 = arith.constant 0 : i32
    return %c0_i32, %c0_i32_0 : i32, i32
  }
  func.func @transform_6(%arg0: i32) -> (i32, i32) {
    %c0_i32 = arith.constant 0 : i32
    %c0_i32_0 = arith.constant 0 : i32
    %c0_i32_1 = arith.constant 0 : i32
    return %c0_i32, %c0_i32_0 : i32, i32
  }
  func.func @transform_7(%arg0: i32) -> (i32, i32) {
    %c0_i32 = arith.constant 0 : i32
    %c0_i32_0 = arith.constant 0 : i32
    %c0_i32_1 = arith.constant 0 : i32
    return %c0_i32, %c0_i32_0 : i32, i32
  }
  func.func @transform_8(%arg0: i32) -> (i32, i32) {
    %c0_i32 = arith.constant 0 : i32
    %c0_i32_0 = arith.constant 0 : i32
    %c0_i32_1 = arith.constant 0 : i32
    return %c0_i32, %c0_i32_0 : i32, i32
  }
  func.func @transform_9(%arg0: i32) -> (i32, i32) {
    %c0_i32 = arith.constant 0 : i32
    %c0_i32_0 = arith.constant 0 : i32
    %c0_i32_1 = arith.constant 0 : i32
    return %c0_i32, %c0_i32_0 : i32, i32
  }
  func.func @transform_10(%arg0: i32) -> (i32, i32) {
    %c0_i32 = arith.constant 0 : i32
    %c0_i32_0 = arith.constant 0 : i32
    %c0_i32_1 = arith.constant 0 : i32
    return %c0_i32, %c0_i32_0 : i32, i32
  }
  func.func @transform_11(%arg0: i32) -> (i32, i32) {
    %c0_i32 = arith.constant 0 : i32
    %c0_i32_0 = arith.constant 0 : i32
    %c0_i32_1 = arith.constant 0 : i32
    return %c0_i32, %c0_i32_0 : i32, i32
  }
  func.func @transform_12(%arg0: i32) -> (i32, i32) {
    %c0_i32 = arith.constant 0 : i32
    %c0_i32_0 = arith.constant 0 : i32
    %c0_i32_1 = arith.constant 0 : i32
    return %c0_i32, %c0_i32_0 : i32, i32
  }
}

</mosaic_0001>

<llo_original>
// kernel: latent_encoder_forward.1
$region0: #{latent_encoder_forward.1}
  #allocation0 [shape = 'u32[]', space=smem, size = 0x4, offset = 0x4, fixed_abs, tag = 'smem constant byte address 0x4 - core index']
  #allocation1 [shape = 'u32[144,128]{1,0:T(1,128)}', space=vmem, size = 0x12000, scoped, tag = 'internal scratch']
  #allocation2 [shape = 'f32[8,1024]{1,0:T(8,128)}', space=vmem, size = 0x8000, scoped, tag = 'scratch operand']
  %s0 = inlined_call_operand.vmem [shape: f32[5,1024], index: 0, kind: input, shape index: {}]
  %s1 = inlined_call_operand.vmem [shape: f32[32,5], index: 1, kind: input, shape index: {}]
  %s2 = inlined_call_operand.vmem [shape: f32[32,32], index: 2, kind: input, shape index: {}]
  %s3 = inlined_call_operand.vmem [shape: f32[32,1], index: 3, kind: input, shape index: {}]
  %s4 = inlined_call_operand.vmem [shape: f32[8,32], index: 4, kind: input, shape index: {}]
  %s5 = inlined_call_operand.vmem [shape: f32[8,1], index: 5, kind: input, shape index: {}]
  %s6 = inlined_call_operand.vmem [shape: f32[8,8], index: 6, kind: input, shape index: {}]
  %s7 = inlined_call_operand.vmem [shape: f32[8,1], index: 7, kind: input, shape index: {}]
  %s8 = inlined_call_operand.vmem [shape: f32[8,8], index: 8, kind: input, shape index: {}]
  %s9 = inlined_call_operand.vmem [shape: f32[8,1], index: 9, kind: input, shape index: {}]
  %s10 = inlined_call_operand.vmem [shape: f32[8,8], index: 10, kind: input, shape index: {}]
  %s11 = inlined_call_operand.vmem [shape: f32[8,1], index: 11, kind: input, shape index: {}]
  %s12 = inlined_call_operand.vmem [shape: f32[8,2], index: 12, kind: output, shape index: {}]
  %s13 = sld [smem:[#allocation0]]
  $region74: #{latent_encoder_forward.1} parent=0
    _
  %s15 = ssub.s32 1, %s13
  %s16 = scalar_select 0, %s15, %s13
  // Predicated region
  $region2: #{latent_encoder_forward.1} parent=0 // pred_check
    _
  $region3: #{latent_encoder_forward.1} parent=0 // pred_check_branch
    %18 = sbr.rel (0) target = $region5
  $region4: #{latent_encoder_forward.1} parent=0 // pred_region
    _
  $region5: #{latent_encoder_forward.1} parent=0 // pred_fallthru
    _
  // Predicated region
  $region6: #{latent_encoder_forward.1} parent=0 // pred_check
    _
  $region7: #{latent_encoder_forward.1} parent=0 // pred_check_branch
    %20 = sbr.rel (0) target = $region9
  $region8: #{latent_encoder_forward.1} parent=0 // pred_region
    _
  $region9: #{latent_encoder_forward.1} parent=0 // pred_fallthru
    _
  // Predicated region
  $region10: #{latent_encoder_forward.1} parent=0 // pred_check
    _
  $region11: #{latent_encoder_forward.1} parent=0 // pred_check_branch
    %22 = sbr.rel (0) target = $region13
  $region12: #{latent_encoder_forward.1} parent=0 // pred_region
    _
  $region13: #{latent_encoder_forward.1} parent=0 // pred_fallthru
    _
  // Predicated region
  $region14: #{latent_encoder_forward.1} parent=0 // pred_check
    _
  $region15: #{latent_encoder_forward.1} parent=0 // pred_check_branch
    %24 = sbr.rel (0) target = $region17
  $region16: #{latent_encoder_forward.1} parent=0 // pred_region
    _
  $region17: #{latent_encoder_forward.1} parent=0 // pred_fallthru
    _
  // Predicated region
  $region18: #{latent_encoder_forward.1} parent=0 // pred_check
    _
  $region19: #{latent_encoder_forward.1} parent=0 // pred_check_branch
    %26 = sbr.rel (0) target = $region21
  $region20: #{latent_encoder_forward.1} parent=0 // pred_region
    _
  $region21: #{latent_encoder_forward.1} parent=0 // pred_fallthru
    _
  // Predicated region
  $region22: #{latent_encoder_forward.1} parent=0 // pred_check
    _
  $region23: #{latent_encoder_forward.1} parent=0 // pred_check_branch
    %28 = sbr.rel (0) target = $region25
  $region24: #{latent_encoder_forward.1} parent=0 // pred_region
    _
  $region25: #{latent_encoder_forward.1} parent=0 // pred_fallthru
    _
  // Predicated region
  $region26: #{latent_encoder_forward.1} parent=0 // pred_check
    _
  $region27: #{latent_encoder_forward.1} parent=0 // pred_check_branch
    %30 = sbr.rel (0) target = $region29
  $region28: #{latent_encoder_forward.1} parent=0 // pred_region
    _
  $region29: #{latent_encoder_forward.1} parent=0 // pred_fallthru
    _
  // Predicated region
  $region30: #{latent_encoder_forward.1} parent=0 // pred_check
    _
  $region31: #{latent_encoder_forward.1} parent=0 // pred_check_branch
    %32 = sbr.rel (0) target = $region33
  $region32: #{latent_encoder_forward.1} parent=0 // pred_region
    _
  $region33: #{latent_encoder_forward.1} parent=0 // pred_fallthru
    _
  // Predicated region
  $region34: #{latent_encoder_forward.1} parent=0 // pred_check
    _
  $region35: #{latent_encoder_forward.1} parent=0 // pred_check_branch
    %34 = sbr.rel (0) target = $region37
  $region36: #{latent_encoder_forward.1} parent=0 // pred_region
    _
  $region37: #{latent_encoder_forward.1} parent=0 // pred_fallthru
    _
  // Predicated region
  $region38: #{latent_encoder_forward.1} parent=0 // pred_check
    _
  $region39: #{latent_encoder_forward.1} parent=0 // pred_check_branch
    %36 = sbr.rel (0) target = $region41
  $region40: #{latent_encoder_forward.1} parent=0 // pred_region
    _
  $region41: #{latent_encoder_forward.1} parent=0 // pred_fallthru
    _
  // Predicated region
  $region42: #{latent_encoder_forward.1} parent=0 // pred_check
    _
  $region43: #{latent_encoder_forward.1} parent=0 // pred_check_branch
    %38 = sbr.rel (0) target = $region45
  $region44: #{latent_encoder_forward.1} parent=0 // pred_region
    _
  $region45: #{latent_encoder_forward.1} parent=0 // pred_fallthru
    _
  // Predicated region
  $region46: #{latent_encoder_forward.1} parent=0 // pred_check
    _
  $region47: #{latent_encoder_forward.1} parent=0 // pred_check_branch
    %40 = sbr.rel (0) target = $region49
  $region48: #{latent_encoder_forward.1} parent=0 // pred_region
    _
  $region49: #{latent_encoder_forward.1} parent=0 // pred_fallthru
    _
  %p41 = scmp.eq.s32.totalorder 0, 0
  // Predicated region
  $region50: #{latent_encoder_forward.1} parent=0 // pred_check
    %p42 = pneg %p41
  $region51: #{latent_encoder_forward.1} parent=0 // pred_check_branch
    %44 = sbr.rel (%p42) target = $region53
  $region52: #{latent_encoder_forward.1} parent=0 // pred_region
    %45 = vst [vmem:[#allocation2] sm:$0xff] 0.0
    %46 = vst [vmem:[#allocation2 + $0x8] sm:$0xff] 0.0
    %47 = vst [vmem:[#allocation2 + $0x10] sm:$0xff] 0.0
    %48 = vst [vmem:[#allocation2 + $0x18] sm:$0xff] 0.0
    %49 = vst [vmem:[#allocation2 + $0x20] sm:$0xff] 0.0
    %50 = vst [vmem:[#allocation2 + $0x28] sm:$0xff] 0.0
    %51 = vst [vmem:[#allocation2 + $0x30] sm:$0xff] 0.0
    %52 = vst [vmem:[#allocation2 + $0x38] sm:$0xff] 0.0
  $region53: #{latent_encoder_forward.1} parent=0 // pred_fallthru
    _
  %v53 = vld [vmem:[%s0] sm:$0x1f]
  %v54 = vld [vmem:[%s0 + $0x8] sm:$0x1f]
  %v55 = vld [vmem:[%s0 + $0x10] sm:$0x1f]
  %v56 = vld [vmem:[%s0 + $0x18] sm:$0x1f]
  %v57 = vld [vmem:[%s0 + $0x20] sm:$0x1f]
  %v58 = vld [vmem:[%s0 + $0x28] sm:$0x1f]
  %v59 = vld [vmem:[%s0 + $0x30] sm:$0x1f]
  %v60 = vld [vmem:[%s0 + $0x38] sm:$0x1f]
  %v61 = vld [vmem:[%s1] sm:$0xff]
  %v62 = vld [vmem:[%s1 + $0x8] sm:$0xff]
  %v63 = vld [vmem:[%s1 + $0x10] sm:$0xff]
  %v64 = vld [vmem:[%s1 + $0x18] sm:$0xff]
  %vm65 = vcmask 39936
  %v67 = vsel %vm65, %v61, 0
  %v70 = vsel %vm65, %v62, 0
  %v73 = vsel %vm65, %v63, 0
  %v76 = vsel %vm65, %v64, 0
  %vm78 = vcmask 1044480
  %v80 = vsel %vm78, %v53, 0
  %v83 = vsel %vm78, %v54, 0
  %v86 = vsel %vm78, %v55, 0
  %v89 = vsel %vm78, %v56, 0
  %v92 = vsel %vm78, %v57, 0
  %v95 = vsel %vm78, %v58, 0
  %v98 = vsel %vm78, %v59, 0
  %v101 = vsel %vm78, %v60, 0
  %103 = vmatprep.subr.mxu0 0.0
  %104 = vmatpush1.msra.mxu0 0.0
  %105 = vmatprep.subr.mxu0 0.0
  %106 = vmatpush1.msra.mxu0 0.0
  %107 = vmatprep.subr.mxu0 0.0
  %108 = vmatpush1.msra.mxu0 0.0
  %109 = vmatprep.subr.mxu0 0.0
  %110 = vmatpush1.msra.mxu0 0.0
  %111 = vmatprep.subr.mxu0 0.0
  %112 = vmatpush1.msra.mxu0 0.0
  %113 = vmatprep.subr.mxu0 0.0
  %114 = vmatpush1.msra.mxu0 0.0
  %115 = vmatprep.subr.mxu0 0.0
  %116 = vmatpush1.msra.mxu0 0.0
  %117 = vmatprep.subr.mxu0 0.0
  %118 = vmatpush1.msra.mxu0 0.0
  %119 = vmatprep.subr.mxu0 0.0
  %120 = vmatpush1.msra.mxu0 0.0
  %121 = vmatprep.subr.mxu0 0.0
  %122 = vmatpush1.msra.mxu0 0.0
  %123 = vmatprep.subr.mxu0 0.0
  %124 = vmatpush1.msra.mxu0 0.0
  %125 = vmatprep.subr.mxu0 0.0
  %126 = vmatpush1.msra.mxu0 0.0
  %127 = vmatprep.subr.mxu0 0.0
  %128 = vmatpush1.msra.mxu0 0.0
  %129 = vmatprep.subr.mxu0 0.0
  %130 = vmatpush1.msra.mxu0 0.0
  %131 = vmatprep.subr.mxu0 0.0
  %132 = vmatpush1.msra.mxu0 0.0
  %133 = vmatprep.subr.mxu0 %v83
  %134 = vmatpush1.msra.mxu0 %v80
  %135 = vmatprep.subr.mxu0 0.0
  %136 = vmatpush2.msra.mxu0 0.0
  %137 = vmatprep.subr.mxu0 0.0
  %138 = vmatpush2.msra.mxu0 0.0
  %139 = vmatprep.subr.mxu0 0.0
  %140 = vmatpush2.msra.mxu0 0.0
  %141 = vmatprep.subr.mxu0 0.0
  %142 = vmatpush2.msra.mxu0 0.0
  %143 = vmatprep.subr.mxu0 0.0
  %144 = vmatpush2.msra.mxu0 0.0
  %145 = vmatprep.subr.mxu0 0.0
  %146 = vmatpush2.msra.mxu0 0.0
  %147 = vmatprep.subr.mxu0 0.0
  %148 = vmatpush2.msra.mxu0 0.0
  %149 = vmatprep.subr.mxu0 0.0
  %150 = vmatpush2.msra.mxu0 0.0
  %151 = vmatprep.subr.mxu0 0.0
  %152 = vmatpush2.msra.mxu0 0.0
  %153 = vmatprep.subr.mxu0 0.0
  %154 = vmatpush2.msra.mxu0 0.0
  %155 = vmatprep.subr.mxu0 0.0
  %156 = vmatpush2.msra.mxu0 0.0
  %157 = vmatprep.subr.mxu0 0.0
  %158 = vmatpush2.msra.mxu0 0.0
  %159 = vmatprep.subr.mxu0 0.0
  %160 = vmatpush2.msra.mxu0 0.0
  %161 = vmatprep.subr.mxu0 0.0
  %162 = vmatpush2.msra.mxu0 0.0
  %163 = vmatprep.subr.mxu0 0.0
  %164 = vmatpush2.msra.mxu0 0.0
  %165 = vmatprep.subr.mxu0 0.0
  %166 = vmatpush2.msra.mxu0 0.0
  %167 = vmatprep.mubr.f32.mxu0 0.0
  %168 = vmatmul.mubr.f32.gmra.mxu0 %v67
  %v169 = vpop.f32.mrf.mxu0
  %v170 = vadd.f32 0.0, %v169
  %v171 = vpop.f32.mrf.mxu0
  %v172 = vadd.f32 0.0, %v171
  %173 = vmatprep.mubr.f32.mxu0 0.0
  %174 = vmatmul.mubr.f32.gmra.mxu0 %v70
  %v175 = vpop.f32.mrf.mxu0
  %v176 = vadd.f32 0.0, %v175
  %v177 = vpop.f32.mrf.mxu0
  %v178 = vadd.f32 0.0, %v177
  %179 = vmatprep.mubr.f32.mxu0 0.0
  %180 = vmatmul.mubr.f32.gmra.mxu0 %v73
  %v181 = vpop.f32.mrf.mxu0
  %v182 = vadd.f32 0.0, %v181
  %v183 = vpop.f32.mrf.mxu0
  %v184 = vadd.f32 0.0, %v183
  %185 = vmatprep.mubr.f32.mxu0 0.0
  %186 = vmatmul.mubr.f32.gmra.mxu0 %v76
  %v187 = vpop.f32.mrf.mxu0
  %v188 = vadd.f32 0.0, %v187
  %v189 = vpop.f32.mrf.mxu0
  %v190 = vadd.f32 0.0, %v189
  %191 = vdwg.mxu0
  %192 = vmatprep.subr.mxu0 0.0
  %193 = vmatpush1.msra.mxu0 0.0
  %194 = vmatprep.subr.mxu0 0.0
  %195 = vmatpush1.msra.mxu0 0.0
  %196 = vmatprep.subr.mxu0 0.0
  %197 = vmatpush1.msra.mxu0 0.0
  %198 = vmatprep.subr.mxu0 0.0
  %199 = vmatpush1.msra.mxu0 0.0
  %200 = vmatprep.subr.mxu0 0.0
  %201 = vmatpush1.msra.mxu0 0.0
  %202 = vmatprep.subr.mxu0 0.0
  %203 = vmatpush1.msra.mxu0 0.0
  %204 = vmatprep.subr.mxu0 0.0
  %205 = vmatpush1.msra.mxu0 0.0
  %206 = vmatprep.subr.mxu0 0.0
  %207 = vmatpush1.msra.mxu0 0.0
  %208 = vmatprep.subr.mxu0 0.0
  %209 = vmatpush1.msra.mxu0 0.0
  %210 = vmatprep.subr.mxu0 0.0
  %211 = vmatpush1.msra.mxu0 0.0
  %212 = vmatprep.subr.mxu0 0.0
  %213 = vmatpush1.msra.mxu0 0.0
  %214 = vmatprep.subr.mxu0 0.0
  %215 = vmatpush1.msra.mxu0 0.0
  %216 = vmatprep.subr.mxu0 0.0
  %217 = vmatpush1.msra.mxu0 0.0
  %218 = vmatprep.subr.mxu0 0.0
  %219 = vmatpush1.msra.mxu0 0.0
  %220 = vmatprep.subr.mxu0 0.0
  %221 = vmatpush1.msra.mxu0 0.0
  %222 = vmatprep.subr.mxu0 %v89
  %223 = vmatpush1.msra.mxu0 %v86
  %224 = vmatprep.subr.mxu0 0.0
  %225 = vmatpush2.msra.mxu0 0.0
  %226 = vmatprep.subr.mxu0 0.0
  %227 = vmatpush2.msra.mxu0 0.0
  %228 = vmatprep.subr.mxu0 0.0
  %229 = vmatpush2.msra.mxu0 0.0
  %230 = vmatprep.subr.mxu0 0.0
  %231 = vmatpush2.msra.mxu0 0.0
  %232 = vmatprep.subr.mxu0 0.0
  %233 = vmatpush2.msra.mxu0 0.0
  %234 = vmatprep.subr.mxu0 0.0
  %235 = vmatpush2.msra.mxu0 0.0
  %236 = vmatprep.subr.mxu0 0.0
  %237 = vmatpush2.msra.mxu0 0.0
  %238 = vmatprep.subr.mxu0 0.0
  %239 = vmatpush2.msra.mxu0 0.0
  %240 = vmatprep.subr.mxu0 0.0
  %241 = vmatpush2.msra.mxu0 0.0
  %242 = vmatprep.subr.mxu0 0.0
  %243 = vmatpush2.msra.mxu0 0.0
  %244 = vmatprep.subr.mxu0 0.0
  %245 = vmatpush2.msra.mxu0 0.0
  %246 = vmatprep.subr.mxu0 0.0
  %247 = vmatpush2.msra.mxu0 0.0
  %248 = vmatprep.subr.mxu0 0.0
  %249 = vmatpush2.msra.mxu0 0.0
  %250 = vmatprep.subr.mxu0 0.0
  %251 = vmatpush2.msra.mxu0 0.0
  %252 = vmatprep.subr.mxu0 0.0
  %253 = vmatpush2.msra.mxu0 0.0
  %254 = vmatprep.subr.mxu0 0.0
  %255 = vmatpush2.msra.mxu0 0.0
  %256 = vmatprep.mubr.f32.mxu0 0.0
  %257 = vmatmul.mubr.f32.gmra.mxu0 %v67
  %v258 = vpop.f32.mrf.mxu0
  %v259 = vadd.f32 0.0, %v258
  %v260 = vpop.f32.mrf.mxu0
  %v261 = vadd.f32 0.0, %v260
  %262 = vmatprep.mubr.f32.mxu0 0.0
  %263 = vmatmul.mubr.f32.gmra.mxu0 %v70
  %v264 = vpop.f32.mrf.mxu0
  %v265 = vadd.f32 0.0, %v264
  %v266 = vpop.f32.mrf.mxu0
  %v267 = vadd.f32 0.0, %v266
  %268 = vmatprep.mubr.f32.mxu0 0.0
  %269 = vmatmul.mubr.f32.gmra.mxu0 %v73
  %v270 = vpop.f32.mrf.mxu0
  %v271 = vadd.f32 0.0, %v270
  %v272 = vpop.f32.mrf.mxu0
  %v273 = vadd.f32 0.0, %v272
  %274 = vmatprep.mubr.f32.mxu0 0.0
  %275 = vmatmul.mubr.f32.gmra.mxu0 %v76
  %v276 = vpop.f32.mrf.mxu0
  %v277 = vadd.f32 0.0, %v276
  %v278 = vpop.f32.mrf.mxu0
  %v279 = vadd.f32 0.0, %v278
  %280 = vdwg.mxu0
  %281 = vmatprep.subr.mxu0 0.0
  %282 = vmatpush1.msra.mxu0 0.0
  %283 = vmatprep.subr.mxu0 0.0
  %284 = vmatpush1.msra.mxu0 0.0
  %285 = vmatprep.subr.mxu0 0.0
  %286 = vmatpush1.msra.mxu0 0.0
  %287 = vmatprep.subr.mxu0 0.0
  %288 = vmatpush1.msra.mxu0 0.0
  %289 = vmatprep.subr.mxu0 0.0
  %290 = vmatpush1.msra.mxu0 0.0
  %291 = vmatprep.subr.mxu0 0.0
  %292 = vmatpush1.msra.mxu0 0.0
  %293 = vmatprep.subr.mxu0 0.0
  %294 = vmatpush1.msra.mxu0 0.0
  %295 = vmatprep.subr.mxu0 0.0
  %296 = vmatpush1.msra.mxu0 0.0
  %297 = vmatprep.subr.mxu0 0.0
  %298 = vmatpush1.msra.mxu0 0.0
  %299 = vmatprep.subr.mxu0 0.0
  %300 = vmatpush1.msra.mxu0 0.0
  %301 = vmatprep.subr.mxu0 0.0
  %302 = vmatpush1.msra.mxu0 0.0
  %303 = vmatprep.subr.mxu0 0.0
  %304 = vmatpush1.msra.mxu0 0.0
  %305 = vmatprep.subr.mxu0 0.0
  %306 = vmatpush1.msra.mxu0 0.0
  %307 = vmatprep.subr.mxu0 0.0
  %308 = vmatpush1.msra.mxu0 0.0
  %309 = vmatprep.subr.mxu0 0.0
  %310 = vmatpush1.msra.mxu0 0.0
  %311 = vmatprep.subr.mxu0 %v95
  %312 = vmatpush1.msra.mxu0 %v92
  %313 = vmatprep.subr.mxu0 0.0
  %314 = vmatpush2.msra.mxu0 0.0
  %315 = vmatprep.subr.mxu0 0.0
  %316 = vmatpush2.msra.mxu0 0.0
  %317 = vmatprep.subr.mxu0 0.0
  %318 = vmatpush2.msra.mxu0 0.0
  %319 = vmatprep.subr.mxu0 0.0
  %320 = vmatpush2.msra.mxu0 0.0
  %321 = vmatprep.subr.mxu0 0.0
  %322 = vmatpush2.msra.mxu0 0.0
  %323 = vmatprep.subr.mxu0 0.0
  %324 = vmatpush2.msra.mxu0 0.0
  %325 = vmatprep.subr.mxu0 0.0
  %326 = vmatpush2.msra.mxu0 0.0
  %327 = vmatprep.subr.mxu0 0.0
  %328 = vmatpush2.msra.mxu0 0.0
  %329 = vmatprep.subr.mxu0 0.0
  %330 = vmatpush2.msra.mxu0 0.0
  %331 = vmatprep.subr.mxu0 0.0
  %332 = vmatpush2.msra.mxu0 0.0
  %333 = vmatprep.subr.mxu0 0.0
  %334 = vmatpush2.msra.mxu0 0.0
  %335 = vmatprep.subr.mxu0 0.0
  %336 = vmatpush2.msra.mxu0 0.0
  %337 = vmatprep.subr.mxu0 0.0
  %338 = vmatpush2.msra.mxu0 0.0
  %339 = vmatprep.subr.mxu0 0.0
  %340 = vmatpush2.msra.mxu0 0.0
  %341 = vmatprep.subr.mxu0 0.0
  %342 = vmatpush2.msra.mxu0 0.0
  %343 = vmatprep.subr.mxu0 0.0
  %344 = vmatpush2.msra.mxu0 0.0
  %345 = vmatprep.mubr.f32.mxu0 0.0
  %346 = vmatmul.mubr.f32.gmra.mxu0 %v67
  %v347 = vpop.f32.mrf.mxu0
  %v348 = vadd.f32 0.0, %v347
  %v349 = vpop.f32.mrf.mxu0
  %v350 = vadd.f32 0.0, %v349
  %351 = vmatprep.mubr.f32.mxu0 0.0
  %352 = vmatmul.mubr.f32.gmra.mxu0 %v70
  %v353 = vpop.f32.mrf.mxu0
  %v354 = vadd.f32 0.0, %v353
  %v355 = vpop.f32.mrf.mxu0
  %v356 = vadd.f32 0.0, %v355
  %357 = vmatprep.mubr.f32.mxu0 0.0
  %358 = vmatmul.mubr.f32.gmra.mxu0 %v73
  %v359 = vpop.f32.mrf.mxu0
  %v360 = vadd.f32 0.0, %v359
  %v361 = vpop.f32.mrf.mxu0
  %v362 = vadd.f32 0.0, %v361
  %363 = vmatprep.mubr.f32.mxu0 0.0
  %364 = vmatmul.mubr.f32.gmra.mxu0 %v76
  %v365 = vpop.f32.mrf.mxu0
  %v366 = vadd.f32 0.0, %v365
  %v367 = vpop.f32.mrf.mxu0
  %v368 = vadd.f32 0.0, %v367
  %369 = vdwg.mxu0
  %370 = vmatprep.subr.mxu0 0.0
  %371 = vmatpush1.msra.mxu0 0.0
  %372 = vmatprep.subr.mxu0 0.0
  %373 = vmatpush1.msra.mxu0 0.0
  %374 = vmatprep.subr.mxu0 0.0
  %375 = vmatpush1.msra.mxu0 0.0
  %376 = vmatprep.subr.mxu0 0.0
  %377 = vmatpush1.msra.mxu0 0.0
  %378 = vmatprep.subr.mxu0 0.0
  %379 = vmatpush1.msra.mxu0 0.0
  %380 = vmatprep.subr.mxu0 0.0
  %381 = vmatpush1.msra.mxu0 0.0
  %382 = vmatprep.subr.mxu0 0.0
  %383 = vmatpush1.msra.mxu0 0.0
  %384 = vmatprep.subr.mxu0 0.0
  %385 = vmatpush1.msra.mxu0 0.0
  %386 = vmatprep.subr.mxu0 0.0
  %387 = vmatpush1.msra.mxu0 0.0
  %388 = vmatprep.subr.mxu0 0.0
  %389 = vmatpush1.msra.mxu0 0.0
  %390 = vmatprep.subr.mxu0 0.0
  %391 = vmatpush1.msra.mxu0 0.0
  %392 = vmatprep.subr.mxu0 0.0
  %393 = vmatpush1.msra.mxu0 0.0
  %394 = vmatprep.subr.mxu0 0.0
  %395 = vmatpush1.msra.mxu0 0.0
  %396 = vmatprep.subr.mxu0 0.0
  %397 = vmatpush1.msra.mxu0 0.0
  %398 = vmatprep.subr.mxu0 0.0
  %399 = vmatpush1.msra.mxu0 0.0
  %400 = vmatprep.subr.mxu0 %v101
  %401 = vmatpush1.msra.mxu0 %v98
  %402 = vmatprep.subr.mxu0 0.0
  %403 = vmatpush2.msra.mxu0 0.0
  %404 = vmatprep.subr.mxu0 0.0
  %405 = vmatpush2.msra.mxu0 0.0
  %406 = vmatprep.subr.mxu0 0.0
  %407 = vmatpush2.msra.mxu0 0.0
  %408 = vmatprep.subr.mxu0 0.0
  %409 = vmatpush2.msra.mxu0 0.0
  %410 = vmatprep.subr.mxu0 0.0
  %411 = vmatpush2.msra.mxu0 0.0
  %412 = vmatprep.subr.mxu0 0.0
  %413 = vmatpush2.msra.mxu0 0.0
  %414 = vmatprep.subr.mxu0 0.0
  %415 = vmatpush2.msra.mxu0 0.0
  %416 = vmatprep.subr.mxu0 0.0
  %417 = vmatpush2.msra.mxu0 0.0
  %418 = vmatprep.subr.mxu0 0.0
  %419 = vmatpush2.msra.mxu0 0.0
  %420 = vmatprep.subr.mxu0 0.0
  %421 = vmatpush2.msra.mxu0 0.0
  %422 = vmatprep.subr.mxu0 0.0
  %423 = vmatpush2.msra.mxu0 0.0
  %424 = vmatprep.subr.mxu0 0.0
  %425 = vmatpush2.msra.mxu0 0.0
  %426 = vmatprep.subr.mxu0 0.0
  %427 = vmatpush2.msra.mxu0 0.0
  %428 = vmatprep.subr.mxu0 0.0
  %429 = vmatpush2.msra.mxu0 0.0
  %430 = vmatprep.subr.mxu0 0.0
  %431 = vmatpush2.msra.mxu0 0.0
  %432 = vmatprep.subr.mxu0 0.0
  %433 = vmatpush2.msra.mxu0 0.0
  %434 = vmatprep.mubr.f32.mxu0 0.0
  %435 = vmatmul.mubr.f32.gmra.mxu0 %v67
  %v436 = vpop.f32.mrf.mxu0
  %v437 = vadd.f32 0.0, %v436
  %v438 = vpop.f32.mrf.mxu0
  %v439 = vadd.f32 0.0, %v438
  %440 = vmatprep.mubr.f32.mxu0 0.0
  %441 = vmatmul.mubr.f32.gmra.mxu0 %v70
  %v442 = vpop.f32.mrf.mxu0
  %v443 = vadd.f32 0.0, %v442
  %v444 = vpop.f32.mrf.mxu0
  %v445 = vadd.f32 0.0, %v444
  %446 = vmatprep.mubr.f32.mxu0 0.0
  %447 = vmatmul.mubr.f32.gmra.mxu0 %v73
  %v448 = vpop.f32.mrf.mxu0
  %v449 = vadd.f32 0.0, %v448
  %v450 = vpop.f32.mrf.mxu0
  %v451 = vadd.f32 0.0, %v450
  %452 = vmatprep.mubr.f32.mxu0 0.0
  %453 = vmatmul.mubr.f32.gmra.mxu0 %v76
  %v454 = vpop.f32.mrf.mxu0
  %v455 = vadd.f32 0.0, %v454
  %v456 = vpop.f32.mrf.mxu0
  %v457 = vadd.f32 0.0, %v456
  %458 = vdwg.mxu0
  %v459 = vmax.f32 %v170, 0.0
  %v460 = vmax.f32 %v172, 0.0
  %v461 = vmax.f32 %v259, 0.0
  %v462 = vmax.f32 %v261, 0.0
  %v463 = vmax.f32 %v348, 0.0
  %v464 = vmax.f32 %v350, 0.0
  %v465 = vmax.f32 %v437, 0.0
  %v466 = vmax.f32 %v439, 0.0
  %v467 = vmax.f32 %v176, 0.0
  %v468 = vmax.f32 %v178, 0.0
  %v469 = vmax.f32 %v265, 0.0
  %v470 = vmax.f32 %v267, 0.0
  %v471 = vmax.f32 %v354, 0.0
  %v472 = vmax.f32 %v356, 0.0
  %v473 = vmax.f32 %v443, 0.0
  %v474 = vmax.f32 %v445, 0.0
  %v475 = vmax.f32 %v182, 0.0
  %v476 = vmax.f32 %v184, 0.0
  %v477 = vmax.f32 %v271, 0.0
  %v478 = vmax.f32 %v273, 0.0
  %v479 = vmax.f32 %v360, 0.0
  %v480 = vmax.f32 %v362, 0.0
  %v481 = vmax.f32 %v449, 0.0
  %v482 = vmax.f32 %v451, 0.0
  %v483 = vmax.f32 %v188, 0.0
  %v484 = vmax.f32 %v190, 0.0
  %v485 = vmax.f32 %v277, 0.0
  %v486 = vmax.f32 %v279, 0.0
  %v487 = vmax.f32 %v366, 0.0
  %v488 = vmax.f32 %v368, 0.0
  %v489 = vmax.f32 %v455, 0.0
  %v490 = vmax.f32 %v457, 0.0
  %v491 = vld [vmem:[%s2] sm:$0xff]
  %v492 = vld [vmem:[%s2 + $0x8] sm:$0xff]
  %v493 = vld [vmem:[%s2 + $0x10] sm:$0xff]
  %v494 = vld [vmem:[%s2 + $0x18] sm:$0xff]
  %v495 = vld [vmem:[%s3] sm:$0xff]
  %v496 = vld [vmem:[%s3 + $0x8] sm:$0xff]
  %v497 = vld [vmem:[%s3 + $0x10] sm:$0xff]
  %v498 = vld [vmem:[%s3 + $0x18] sm:$0xff]
  %500 = vset.pattern.permute.xlu0 0
  %501 = vperm.xlu0 %500, %v495
  %v502 = vpop.permute.xlu0 %501
  %505 = vset.pattern.permute.xlu0 0
  %506 = vperm.xlu0 %505, %v496
  %v507 = vpop.permute.xlu0 %506
  %510 = vset.pattern.permute.xlu0 0
  %511 = vperm.xlu0 %510, %v497
  %v512 = vpop.permute.xlu0 %511
  %515 = vset.pattern.permute.xlu0 0
  %516 = vperm.xlu0 %515, %v498
  %v517 = vpop.permute.xlu0 %516
  %vm519 = vcmask 261120
  %v521 = vsel %vm519, %v491, 0
  %v524 = vsel %vm519, %v492, 0
  %v527 = vsel %vm519, %v493, 0
  %v530 = vsel %vm519, %v494, 0
  %532 = vmatprep.subr.mxu0 0.0
  %533 = vmatpush1.msra.mxu0 0.0
  %534 = vmatprep.subr.mxu0 0.0
  %535 = vmatpush1.msra.mxu0 0.0
  %536 = vmatprep.subr.mxu0 0.0
  %537 = vmatpush1.msra.mxu0 0.0
  %538 = vmatprep.subr.mxu0 0.0
  %539 = vmatpush1.msra.mxu0 0.0
  %540 = vmatprep.subr.mxu0 0.0
  %541 = vmatpush1.msra.mxu0 0.0
  %542 = vmatprep.subr.mxu0 0.0
  %543 = vmatpush1.msra.mxu0 0.0
  %544 = vmatprep.subr.mxu0 0.0
  %545 = vmatpush1.msra.mxu0 0.0
  %546 = vmatprep.subr.mxu0 0.0
  %547 = vmatpush1.msra.mxu0 0.0
  %548 = vmatprep.subr.mxu0 0.0
  %549 = vmatpush1.msra.mxu0 0.0
  %550 = vmatprep.subr.mxu0 0.0
  %551 = vmatpush1.msra.mxu0 0.0
  %552 = vmatprep.subr.mxu0 0.0
  %553 = vmatpush1.msra.mxu0 0.0
  %554 = vmatprep.subr.mxu0 0.0
  %555 = vmatpush1.msra.mxu0 0.0
  %556 = vmatprep.subr.mxu0 %v484
  %557 = vmatpush1.msra.mxu0 %v483
  %558 = vmatprep.subr.mxu0 %v476
  %559 = vmatpush1.msra.mxu0 %v475
  %560 = vmatprep.subr.mxu0 %v468
  %561 = vmatpush1.msra.mxu0 %v467
  %562 = vmatprep.subr.mxu0 %v460
  %563 = vmatpush1.msra.mxu0 %v459
  %564 = vmatprep.subr.mxu0 0.0
  %565 = vmatpush2.msra.mxu0 0.0
  %566 = vmatprep.subr.mxu0 0.0
  %567 = vmatpush2.msra.mxu0 0.0
  %568 = vmatprep.subr.mxu0 0.0
  %569 = vmatpush2.msra.mxu0 0.0
  %570 = vmatprep.subr.mxu0 0.0
  %571 = vmatpush2.msra.mxu0 0.0
  %572 = vmatprep.subr.mxu0 0.0
  %573 = vmatpush2.msra.mxu0 0.0
  %574 = vmatprep.subr.mxu0 0.0
  %575 = vmatpush2.msra.mxu0 0.0
  %576 = vmatprep.subr.mxu0 0.0
  %577 = vmatpush2.msra.mxu0 0.0
  %578 = vmatprep.subr.mxu0 0.0
  %579 = vmatpush2.msra.mxu0 0.0
  %580 = vmatprep.subr.mxu0 0.0
  %581 = vmatpush2.msra.mxu0 0.0
  %582 = vmatprep.subr.mxu0 0.0
  %583 = vmatpush2.msra.mxu0 0.0
  %584 = vmatprep.subr.mxu0 0.0
  %585 = vmatpush2.msra.mxu0 0.0
  %586 = vmatprep.subr.mxu0 0.0
  %587 = vmatpush2.msra.mxu0 0.0
  %588 = vmatprep.subr.mxu0 0.0
  %589 = vmatpush2.msra.mxu0 0.0
  %590 = vmatprep.subr.mxu0 0.0
  %591 = vmatpush2.msra.mxu0 0.0
  %592 = vmatprep.subr.mxu0 0.0
  %593 = vmatpush2.msra.mxu0 0.0
  %594 = vmatprep.subr.mxu0 0.0
  %595 = vmatpush2.msra.mxu0 0.0
  %596 = vmatprep.mubr.f32.mxu0 0.0
  %597 = vmatmul.mubr.f32.gmra.mxu0 %v521
  %v598 = vpop.f32.mrf.mxu0
  %v599 = vadd.f32 %v502, %v598
  %v600 = vpop.f32.mrf.mxu0
  %v601 = vadd.f32 %v502, %v600
  %602 = vmatprep.mubr.f32.mxu0 0.0
  %603 = vmatmul.mubr.f32.gmra.mxu0 %v524
  %v604 = vpop.f32.mrf.mxu0
  %v605 = vadd.f32 %v507, %v604
  %v606 = vpop.f32.mrf.mxu0
  %v607 = vadd.f32 %v507, %v606
  %608 = vmatprep.mubr.f32.mxu0 0.0
  %609 = vmatmul.mubr.f32.gmra.mxu0 %v527
  %v610 = vpop.f32.mrf.mxu0
  %v611 = vadd.f32 %v512, %v610
  %v612 = vpop.f32.mrf.mxu0
  %v613 = vadd.f32 %v512, %v612
  %614 = vmatprep.mubr.f32.mxu0 0.0
  %615 = vmatmul.mubr.f32.gmra.mxu0 %v530
  %v616 = vpop.f32.mrf.mxu0
  %v617 = vadd.f32 %v517, %v616
  %v618 = vpop.f32.mrf.mxu0
  %v619 = vadd.f32 %v517, %v618
  %620 = vdwg.mxu0
  %621 = vmatprep.subr.mxu0 0.0
  %622 = vmatpush1.msra.mxu0 0.0
  %623 = vmatprep.subr.mxu0 0.0
  %624 = vmatpush1.msra.mxu0 0.0
  %625 = vmatprep.subr.mxu0 0.0
  %626 = vmatpush1.msra.mxu0 0.0
  %627 = vmatprep.subr.mxu0 0.0
  %628 = vmatpush1.msra.mxu0 0.0
  %629 = vmatprep.subr.mxu0 0.0
  %630 = vmatpush1.msra.mxu0 0.0
  %631 = vmatprep.subr.mxu0 0.0
  %632 = vmatpush1.msra.mxu0 0.0
  %633 = vmatprep.subr.mxu0 0.0
  %634 = vmatpush1.msra.mxu0 0.0
  %635 = vmatprep.subr.mxu0 0.0
  %636 = vmatpush1.msra.mxu0 0.0
  %637 = vmatprep.subr.mxu0 0.0
  %638 = vmatpush1.msra.mxu0 0.0
  %639 = vmatprep.subr.mxu0 0.0
  %640 = vmatpush1.msra.mxu0 0.0
  %641 = vmatprep.subr.mxu0 0.0
  %642 = vmatpush1.msra.mxu0 0.0
  %643 = vmatprep.subr.mxu0 0.0
  %644 = vmatpush1.msra.mxu0 0.0
  %645 = vmatprep.subr.mxu0 %v486
  %646 = vmatpush1.msra.mxu0 %v485
  %647 = vmatprep.subr.mxu0 %v478
  %648 = vmatpush1.msra.mxu0 %v477
  %649 = vmatprep.subr.mxu0 %v470
  %650 = vmatpush1.msra.mxu0 %v469
  %651 = vmatprep.subr.mxu0 %v462
  %652 = vmatpush1.msra.mxu0 %v461
  %653 = vmatprep.subr.mxu0 0.0
  %654 = vmatpush2.msra.mxu0 0.0
  %655 = vmatprep.subr.mxu0 0.0
  %656 = vmatpush2.msra.mxu0 0.0
  %657 = vmatprep.subr.mxu0 0.0
  %658 = vmatpush2.msra.mxu0 0.0
  %659 = vmatprep.subr.mxu0 0.0
  %660 = vmatpush2.msra.mxu0 0.0
  %661 = vmatprep.subr.mxu0 0.0
  %662 = vmatpush2.msra.mxu0 0.0
  %663 = vmatprep.subr.mxu0 0.0
  %664 = vmatpush2.msra.mxu0 0.0
  %665 = vmatprep.subr.mxu0 0.0
  %666 = vmatpush2.msra.mxu0 0.0
  %667 = vmatprep.subr.mxu0 0.0
  %668 = vmatpush2.msra.mxu0 0.0
  %669 = vmatprep.subr.mxu0 0.0
  %670 = vmatpush2.msra.mxu0 0.0
  %671 = vmatprep.subr.mxu0 0.0
  %672 = vmatpush2.msra.mxu0 0.0
  %673 = vmatprep.subr.mxu0 0.0
  %674 = vmatpush2.msra.mxu0 0.0
  %675 = vmatprep.subr.mxu0 0.0
  %676 = vmatpush2.msra.mxu0 0.0
  %677 = vmatprep.subr.mxu0 0.0
  %678 = vmatpush2.msra.mxu0 0.0
  %679 = vmatprep.subr.mxu0 0.0
  %680 = vmatpush2.msra.mxu0 0.0
  %681 = vmatprep.subr.mxu0 0.0
  %682 = vmatpush2.msra.mxu0 0.0
  %683 = vmatprep.subr.mxu0 0.0
  %684 = vmatpush2.msra.mxu0 0.0
  %685 = vmatprep.mubr.f32.mxu0 0.0
  %686 = vmatmul.mubr.f32.gmra.mxu0 %v521
  %v687 = vpop.f32.mrf.mxu0
  %v688 = vadd.f32 %v502, %v687
  %v689 = vpop.f32.mrf.mxu0
  %v690 = vadd.f32 %v502, %v689
  %691 = vmatprep.mubr.f32.mxu0 0.0
  %692 = vmatmul.mubr.f32.gmra.mxu0 %v524
  %v693 = vpop.f32.mrf.mxu0
  %v694 = vadd.f32 %v507, %v693
  %v695 = vpop.f32.mrf.mxu0
  %v696 = vadd.f32 %v507, %v695
  %697 = vmatprep.mubr.f32.mxu0 0.0
  %698 = vmatmul.mubr.f32.gmra.mxu0 %v527
  %v699 = vpop.f32.mrf.mxu0
  %v700 = vadd.f32 %v512, %v699
  %v701 = vpop.f32.mrf.mxu0
  %v702 = vadd.f32 %v512, %v701
  %703 = vmatprep.mubr.f32.mxu0 0.0
  %704 = vmatmul.mubr.f32.gmra.mxu0 %v530
  %v705 = vpop.f32.mrf.mxu0
  %v706 = vadd.f32 %v517, %v705
  %v707 = vpop.f32.mrf.mxu0
  %v708 = vadd.f32 %v517, %v707
  %709 = vdwg.mxu0
  %710 = vmatprep.subr.mxu0 0.0
  %711 = vmatpush1.msra.mxu0 0.0
  %712 = vmatprep.subr.mxu0 0.0
  %713 = vmatpush1.msra.mxu0 0.0
  %714 = vmatprep.subr.mxu0 0.0
  %715 = vmatpush1.msra.mxu0 0.0
  %716 = vmatprep.subr.mxu0 0.0
  %717 = vmatpush1.msra.mxu0 0.0
  %718 = vmatprep.subr.mxu0 0.0
  %719 = vmatpush1.msra.mxu0 0.0
  %720 = vmatprep.subr.mxu0 0.0
  %721 = vmatpush1.msra.mxu0 0.0
  %722 = vmatprep.subr.mxu0 0.0
  %723 = vmatpush1.msra.mxu0 0.0
  %724 = vmatprep.subr.mxu0 0.0
  %725 = vmatpush1.msra.mxu0 0.0
  %726 = vmatprep.subr.mxu0 0.0
  %727 = vmatpush1.msra.mxu0 0.0
  %728 = vmatprep.subr.mxu0 0.0
  %729 = vmatpush1.msra.mxu0 0.0
  %730 = vmatprep.subr.mxu0 0.0
  %731 = vmatpush1.msra.mxu0 0.0
  %732 = vmatprep.subr.mxu0 0.0
  %733 = vmatpush1.msra.mxu0 0.0
  %734 = vmatprep.subr.mxu0 %v488
  %735 = vmatpush1.msra.mxu0 %v487
  %736 = vmatprep.subr.mxu0 %v480
  %737 = vmatpush1.msra.mxu0 %v479
  %738 = vmatprep.subr.mxu0 %v472
  %739 = vmatpush1.msra.mxu0 %v471
  %740 = vmatprep.subr.mxu0 %v464
  %741 = vmatpush1.msra.mxu0 %v463
  %742 = vmatprep.subr.mxu0 0.0
  %743 = vmatpush2.msra.mxu0 0.0
  %744 = vmatprep.subr.mxu0 0.0
  %745 = vmatpush2.msra.mxu0 0.0
  %746 = vmatprep.subr.mxu0 0.0
  %747 = vmatpush2.msra.mxu0 0.0
  %748 = vmatprep.subr.mxu0 0.0
  %749 = vmatpush2.msra.mxu0 0.0
  %750 = vmatprep.subr.mxu0 0.0
  %751 = vmatpush2.msra.mxu0 0.0
  %752 = vmatprep.subr.mxu0 0.0
  %753 = vmatpush2.msra.mxu0 0.0
  %754 = vmatprep.subr.mxu0 0.0
  %755 = vmatpush2.msra.mxu0 0.0
  %756 = vmatprep.subr.mxu0 0.0
  %757 = vmatpush2.msra.mxu0 0.0
  %758 = vmatprep.subr.mxu0 0.0
  %759 = vmatpush2.msra.mxu0 0.0
  %760 = vmatprep.subr.mxu0 0.0
  %761 = vmatpush2.msra.mxu0 0.0
  %762 = vmatprep.subr.mxu0 0.0
  %763 = vmatpush2.msra.mxu0 0.0
  %764 = vmatprep.subr.mxu0 0.0
  %765 = vmatpush2.msra.mxu0 0.0
  %766 = vmatprep.subr.mxu0 0.0
  %767 = vmatpush2.msra.mxu0 0.0
  %768 = vmatprep.subr.mxu0 0.0
  %769 = vmatpush2.msra.mxu0 0.0
  %770 = vmatprep.subr.mxu0 0.0
  %771 = vmatpush2.msra.mxu0 0.0
  %772 = vmatprep.subr.mxu0 0.0
  %773 = vmatpush2.msra.mxu0 0.0
  %774 = vmatprep.mubr.f32.mxu0 0.0
  %775 = vmatmul.mubr.f32.gmra.mxu0 %v521
  %v776 = vpop.f32.mrf.mxu0
  %v777 = vadd.f32 %v502, %v776
  %v778 = vpop.f32.mrf.mxu0
  %v779 = vadd.f32 %v502, %v778
  %780 = vmatprep.mubr.f32.mxu0 0.0
  %781 = vmatmul.mubr.f32.gmra.mxu0 %v524
  %v782 = vpop.f32.mrf.mxu0
  %v783 = vadd.f32 %v507, %v782
  %v784 = vpop.f32.mrf.mxu0
  %v785 = vadd.f32 %v507, %v784
  %786 = vmatprep.mubr.f32.mxu0 0.0
  %787 = vmatmul.mubr.f32.gmra.mxu0 %v527
  %v788 = vpop.f32.mrf.mxu0
  %v789 = vadd.f32 %v512, %v788
  %v790 = vpop.f32.mrf.mxu0
  %v791 = vadd.f32 %v512, %v790
  %792 = vmatprep.mubr.f32.mxu0 0.0
  %793 = vmatmul.mubr.f32.gmra.mxu0 %v530
  %v794 = vpop.f32.mrf.mxu0
  %v795 = vadd.f32 %v517, %v794
  %v796 = vpop.f32.mrf.mxu0
  %v797 = vadd.f32 %v517, %v796
  %798 = vdwg.mxu0
  %799 = vmatprep.subr.mxu0 0.0
  %800 = vmatpush1.msra.mxu0 0.0
  %801 = vmatprep.subr.mxu0 0.0
  %802 = vmatpush1.msra.mxu0 0.0
  %803 = vmatprep.subr.mxu0 0.0
  %804 = vmatpush1.msra.mxu0 0.0
  %805 = vmatprep.subr.mxu0 0.0
  %806 = vmatpush1.msra.mxu0 0.0
  %807 = vmatprep.subr.mxu0 0.0
  %808 = vmatpush1.msra.mxu0 0.0
  %809 = vmatprep.subr.mxu0 0.0
  %810 = vmatpush1.msra.mxu0 0.0
  %811 = vmatprep.subr.mxu0 0.0
  %812 = vmatpush1.msra.mxu0 0.0
  %813 = vmatprep.subr.mxu0 0.0
  %814 = vmatpush1.msra.mxu0 0.0
  %815 = vmatprep.subr.mxu0 0.0
  %816 = vmatpush1.msra.mxu0 0.0
  %817 = vmatprep.subr.mxu0 0.0
  %818 = vmatpush1.msra.mxu0 0.0
  %819 = vmatprep.subr.mxu0 0.0
  %820 = vmatpush1.msra.mxu0 0.0
  %821 = vmatprep.subr.mxu0 0.0
  %822 = vmatpush1.msra.mxu0 0.0
  %823 = vmatprep.subr.mxu0 %v490
  %824 = vmatpush1.msra.mxu0 %v489
  %825 = vmatprep.subr.mxu0 %v482
  %826 = vmatpush1.msra.mxu0 %v481
  %827 = vmatprep.subr.mxu0 %v474
  %828 = vmatpush1.msra.mxu0 %v473
  %829 = vmatprep.subr.mxu0 %v466
  %830 = vmatpush1.msra.mxu0 %v465
  %831 = vmatprep.subr.mxu0 0.0
  %832 = vmatpush2.msra.mxu0 0.0
  %833 = vmatprep.subr.mxu0 0.0
  %834 = vmatpush2.msra.mxu0 0.0
  %835 = vmatprep.subr.mxu0 0.0
  %836 = vmatpush2.msra.mxu0 0.0
  %837 = vmatprep.subr.mxu0 0.0
  %838 = vmatpush2.msra.mxu0 0.0
  %839 = vmatprep.subr.mxu0 0.0
  %840 = vmatpush2.msra.mxu0 0.0
  %841 = vmatprep.subr.mxu0 0.0
  %842 = vmatpush2.msra.mxu0 0.0
  %843 = vmatprep.subr.mxu0 0.0
  %844 = vmatpush2.msra.mxu0 0.0
  %845 = vmatprep.subr.mxu0 0.0
  %846 = vmatpush2.msra.mxu0 0.0
  %847 = vmatprep.subr.mxu0 0.0
  %848 = vmatpush2.msra.mxu0 0.0
  %849 = vmatprep.subr.mxu0 0.0
  %850 = vmatpush2.msra.mxu0 0.0
  %851 = vmatprep.subr.mxu0 0.0
  %852 = vmatpush2.msra.mxu0 0.0
  %853 = vmatprep.subr.mxu0 0.0
  %854 = vmatpush2.msra.mxu0 0.0
  %855 = vmatprep.subr.mxu0 0.0
  %856 = vmatpush2.msra.mxu0 0.0
  %857 = vmatprep.subr.mxu0 0.0
  %858 = vmatpush2.msra.mxu0 0.0
  %859 = vmatprep.subr.mxu0 0.0
  %860 = vmatpush2.msra.mxu0 0.0
  %861 = vmatprep.subr.mxu0 0.0
  %862 = vmatpush2.msra.mxu0 0.0
  %863 = vmatprep.mubr.f32.mxu0 0.0
  %864 = vmatmul.mubr.f32.gmra.mxu0 %v521
  %v865 = vpop.f32.mrf.mxu0
  %v866 = vadd.f32 %v502, %v865
  %v867 = vpop.f32.mrf.mxu0
  %v868 = vadd.f32 %v502, %v867
  %869 = vmatprep.mubr.f32.mxu0 0.0
  %870 = vmatmul.mubr.f32.gmra.mxu0 %v524
  %v871 = vpop.f32.mrf.mxu0
  %v872 = vadd.f32 %v507, %v871
  %v873 = vpop.f32.mrf.mxu0
  %v874 = vadd.f32 %v507, %v873
  %875 = vmatprep.mubr.f32.mxu0 0.0
  %876 = vmatmul.mubr.f32.gmra.mxu0 %v527
  %v877 = vpop.f32.mrf.mxu0
  %v878 = vadd.f32 %v512, %v877
  %v879 = vpop.f32.mrf.mxu0
  %v880 = vadd.f32 %v512, %v879
  %881 = vmatprep.mubr.f32.mxu0 0.0
  %882 = vmatmul.mubr.f32.gmra.mxu0 %v530
  %v883 = vpop.f32.mrf.mxu0
  %v884 = vadd.f32 %v517, %v883
  %v885 = vpop.f32.mrf.mxu0
  %v886 = vadd.f32 %v517, %v885
  %887 = vdwg.mxu0
  %v888 = vmax.f32 %v599, 0.0
  %v889 = vmax.f32 %v601, 0.0
  %v890 = vmax.f32 %v688, 0.0
  %v891 = vmax.f32 %v690, 0.0
  %v892 = vmax.f32 %v777, 0.0
  %v893 = vmax.f32 %v779, 0.0
  %v894 = vmax.f32 %v866, 0.0
  %v895 = vmax.f32 %v868, 0.0
  %v896 = vmax.f32 %v605, 0.0
  %v897 = vmax.f32 %v607, 0.0
  %v898 = vmax.f32 %v694, 0.0
  %v899 = vmax.f32 %v696, 0.0
  %v900 = vmax.f32 %v783, 0.0
  %v901 = vmax.f32 %v785, 0.0
  %v902 = vmax.f32 %v872, 0.0
  %v903 = vmax.f32 %v874, 0.0
  %v904 = vmax.f32 %v611, 0.0
  %v905 = vmax.f32 %v613, 0.0
  %v906 = vmax.f32 %v700, 0.0
  %v907 = vmax.f32 %v702, 0.0
  %v908 = vmax.f32 %v789, 0.0
  %v909 = vmax.f32 %v791, 0.0
  %v910 = vmax.f32 %v878, 0.0
  %v911 = vmax.f32 %v880, 0.0
  %v912 = vmax.f32 %v617, 0.0
  %v913 = vmax.f32 %v619, 0.0
  %v914 = vmax.f32 %v706, 0.0
  %v915 = vmax.f32 %v708, 0.0
  %v916 = vmax.f32 %v795, 0.0
  %v917 = vmax.f32 %v797, 0.0
  %v918 = vmax.f32 %v884, 0.0
  %v919 = vmax.f32 %v886, 0.0
  %v920 = vld [vmem:[%s4] sm:$0xff]
  %v921 = vld [vmem:[%s5] sm:$0xff]
  %923 = vset.pattern.permute.xlu0 0
  %924 = vperm.xlu0 %923, %v921
  %v925 = vpop.permute.xlu0 %924
  %v928 = vsel %vm519, %v920, 0
  %930 = vmatprep.subr.mxu0 0.0
  %931 = vmatpush1.msra.mxu0 0.0
  %932 = vmatprep.subr.mxu0 0.0
  %933 = vmatpush1.msra.mxu0 0.0
  %934 = vmatprep.subr.mxu0 0.0
  %935 = vmatpush1.msra.mxu0 0.0
  %936 = vmatprep.subr.mxu0 0.0
  %937 = vmatpush1.msra.mxu0 0.0
  %938 = vmatprep.subr.mxu0 0.0
  %939 = vmatpush1.msra.mxu0 0.0
  %940 = vmatprep.subr.mxu0 0.0
  %941 = vmatpush1.msra.mxu0 0.0
  %942 = vmatprep.subr.mxu0 0.0
  %943 = vmatpush1.msra.mxu0 0.0
  %944 = vmatprep.subr.mxu0 0.0
  %945 = vmatpush1.msra.mxu0 0.0
  %946 = vmatprep.subr.mxu0 0.0
  %947 = vmatpush1.msra.mxu0 0.0
  %948 = vmatprep.subr.mxu0 0.0
  %949 = vmatpush1.msra.mxu0 0.0
  %950 = vmatprep.subr.mxu0 0.0
  %951 = vmatpush1.msra.mxu0 0.0
  %952 = vmatprep.subr.mxu0 0.0
  %953 = vmatpush1.msra.mxu0 0.0
  %954 = vmatprep.subr.mxu0 %v913
  %955 = vmatpush1.msra.mxu0 %v912
  %956 = vmatprep.subr.mxu0 %v905
  %957 = vmatpush1.msra.mxu0 %v904
  %958 = vmatprep.subr.mxu0 %v897
  %959 = vmatpush1.msra.mxu0 %v896
  %960 = vmatprep.subr.mxu0 %v889
  %961 = vmatpush1.msra.mxu0 %v888
  %962 = vmatprep.subr.mxu0 0.0
  %963 = vmatpush2.msra.mxu0 0.0
  %964 = vmatprep.subr.mxu0 0.0
  %965 = vmatpush2.msra.mxu0 0.0
  %966 = vmatprep.subr.mxu0 0.0
  %967 = vmatpush2.msra.mxu0 0.0
  %968 = vmatprep.subr.mxu0 0.0
  %969 = vmatpush2.msra.mxu0 0.0
  %970 = vmatprep.subr.mxu0 0.0
  %971 = vmatpush2.msra.mxu0 0.0
  %972 = vmatprep.subr.mxu0 0.0
  %973 = vmatpush2.msra.mxu0 0.0
  %974 = vmatprep.subr.mxu0 0.0
  %975 = vmatpush2.msra.mxu0 0.0
  %976 = vmatprep.subr.mxu0 0.0
  %977 = vmatpush2.msra.mxu0 0.0
  %978 = vmatprep.subr.mxu0 0.0
  %979 = vmatpush2.msra.mxu0 0.0
  %980 = vmatprep.subr.mxu0 0.0
  %981 = vmatpush2.msra.mxu0 0.0
  %982 = vmatprep.subr.mxu0 0.0
  %983 = vmatpush2.msra.mxu0 0.0
  %984 = vmatprep.subr.mxu0 0.0
  %985 = vmatpush2.msra.mxu0 0.0
  %986 = vmatprep.subr.mxu0 0.0
  %987 = vmatpush2.msra.mxu0 0.0
  %988 = vmatprep.subr.mxu0 0.0
  %989 = vmatpush2.msra.mxu0 0.0
  %990 = vmatprep.subr.mxu0 0.0
  %991 = vmatpush2.msra.mxu0 0.0
  %992 = vmatprep.subr.mxu0 0.0
  %993 = vmatpush2.msra.mxu0 0.0
  %994 = vmatprep.mubr.f32.mxu0 0.0
  %995 = vmatmul.mubr.f32.gmra.mxu0 %v928
  %v996 = vpop.f32.mrf.mxu0
  %v997 = vadd.f32 %v925, %v996
  %v998 = vpop.f32.mrf.mxu0
  %v999 = vadd.f32 %v925, %v998
  %1000 = vdwg.mxu0
  %1001 = vmatprep.subr.mxu0 0.0
  %1002 = vmatpush1.msra.mxu0 0.0
  %1003 = vmatprep.subr.mxu0 0.0
  %1004 = vmatpush1.msra.mxu0 0.0
  %1005 = vmatprep.subr.mxu0 0.0
  %1006 = vmatpush1.msra.mxu0 0.0
  %1007 = vmatprep.subr.mxu0 0.0
  %1008 = vmatpush1.msra.mxu0 0.0
  %1009 = vmatprep.subr.mxu0 0.0
  %1010 = vmatpush1.msra.mxu0 0.0
  %1011 = vmatprep.subr.mxu0 0.0
  %1012 = vmatpush1.msra.mxu0 0.0
  %1013 = vmatprep.subr.mxu0 0.0
  %1014 = vmatpush1.msra.mxu0 0.0
  %1015 = vmatprep.subr.mxu0 0.0
  %1016 = vmatpush1.msra.mxu0 0.0
  %1017 = vmatprep.subr.mxu0 0.0
  %1018 = vmatpush1.msra.mxu0 0.0
  %1019 = vmatprep.subr.mxu0 0.0
  %1020 = vmatpush1.msra.mxu0 0.0
  %1021 = vmatprep.subr.mxu0 0.0
  %1022 = vmatpush1.msra.mxu0 0.0
  %1023 = vmatprep.subr.mxu0 0.0
  %1024 = vmatpush1.msra.mxu0 0.0
  %1025 = vmatprep.subr.mxu0 %v915
  %1026 = vmatpush1.msra.mxu0 %v914
  %1027 = vmatprep.subr.mxu0 %v907
  %1028 = vmatpush1.msra.mxu0 %v906
  %1029 = vmatprep.subr.mxu0 %v899
  %1030 = vmatpush1.msra.mxu0 %v898
  %1031 = vmatprep.subr.mxu0 %v891
  %1032 = vmatpush1.msra.mxu0 %v890
  %1033 = vmatprep.subr.mxu0 0.0
  %1034 = vmatpush2.msra.mxu0 0.0
  %1035 = vmatprep.subr.mxu0 0.0
  %1036 = vmatpush2.msra.mxu0 0.0
  %1037 = vmatprep.subr.mxu0 0.0
  %1038 = vmatpush2.msra.mxu0 0.0
  %1039 = vmatprep.subr.mxu0 0.0
  %1040 = vmatpush2.msra.mxu0 0.0
  %1041 = vmatprep.subr.mxu0 0.0
  %1042 = vmatpush2.msra.mxu0 0.0
  %1043 = vmatprep.subr.mxu0 0.0
  %1044 = vmatpush2.msra.mxu0 0.0
  %1045 = vmatprep.subr.mxu0 0.0
  %1046 = vmatpush2.msra.mxu0 0.0
  %1047 = vmatprep.subr.mxu0 0.0
  %1048 = vmatpush2.msra.mxu0 0.0
  %1049 = vmatprep.subr.mxu0 0.0
  %1050 = vmatpush2.msra.mxu0 0.0
  %1051 = vmatprep.subr.mxu0 0.0
  %1052 = vmatpush2.msra.mxu0 0.0
  %1053 = vmatprep.subr.mxu0 0.0
  %1054 = vmatpush2.msra.mxu0 0.0
  %1055 = vmatprep.subr.mxu0 0.0
  %1056 = vmatpush2.msra.mxu0 0.0
  %1057 = vmatprep.subr.mxu0 0.0
  %1058 = vmatpush2.msra.mxu0 0.0
  %1059 = vmatprep.subr.mxu0 0.0
  %1060 = vmatpush2.msra.mxu0 0.0
  %1061 = vmatprep.subr.mxu0 0.0
  %1062 = vmatpush2.msra.mxu0 0.0
  %1063 = vmatprep.subr.mxu0 0.0
  %1064 = vmatpush2.msra.mxu0 0.0
  %1065 = vmatprep.mubr.f32.mxu0 0.0
  %1066 = vmatmul.mubr.f32.gmra.mxu0 %v928
  %v1067 = vpop.f32.mrf.mxu0
  %v1068 = vadd.f32 %v925, %v1067
  %v1069 = vpop.f32.mrf.mxu0
  %v1070 = vadd.f32 %v925, %v1069
  %1071 = vdwg.mxu0
  %1072 = vmatprep.subr.mxu0 0.0
  %1073 = vmatpush1.msra.mxu0 0.0
  %1074 = vmatprep.subr.mxu0 0.0
  %1075 = vmatpush1.msra.mxu0 0.0
  %1076 = vmatprep.subr.mxu0 0.0
  %1077 = vmatpush1.msra.mxu0 0.0
  %1078 = vmatprep.subr.mxu0 0.0
  %1079 = vmatpush1.msra.mxu0 0.0
  %1080 = vmatprep.subr.mxu0 0.0
  %1081 = vmatpush1.msra.mxu0 0.0
  %1082 = vmatprep.subr.mxu0 0.0
  %1083 = vmatpush1.msra.mxu0 0.0
  %1084 = vmatprep.subr.mxu0 0.0
  %1085 = vmatpush1.msra.mxu0 0.0
  %1086 = vmatprep.subr.mxu0 0.0
  %1087 = vmatpush1.msra.mxu0 0.0
  %1088 = vmatprep.subr.mxu0 0.0
  %1089 = vmatpush1.msra.mxu0 0.0
  %1090 = vmatprep.subr.mxu0 0.0
  %1091 = vmatpush1.msra.mxu0 0.0
  %1092 = vmatprep.subr.mxu0 0.0
  %1093 = vmatpush1.msra.mxu0 0.0
  %1094 = vmatprep.subr.mxu0 0.0
  %1095 = vmatpush1.msra.mxu0 0.0
  %1096 = vmatprep.subr.mxu0 %v917
  %1097 = vmatpush1.msra.mxu0 %v916
  %1098 = vmatprep.subr.mxu0 %v909
  %1099 = vmatpush1.msra.mxu0 %v908
  %1100 = vmatprep.subr.mxu0 %v901
  %1101 = vmatpush1.msra.mxu0 %v900
  %1102 = vmatprep.subr.mxu0 %v893
  %1103 = vmatpush1.msra.mxu0 %v892
  %1104 = vmatprep.subr.mxu0 0.0
  %1105 = vmatpush2.msra.mxu0 0.0
  %1106 = vmatprep.subr.mxu0 0.0
  %1107 = vmatpush2.msra.mxu0 0.0
  %1108 = vmatprep.subr.mxu0 0.0
  %1109 = vmatpush2.msra.mxu0 0.0
  %1110 = vmatprep.subr.mxu0 0.0
  %1111 = vmatpush2.msra.mxu0 0.0
  %1112 = vmatprep.subr.mxu0 0.0
  %1113 = vmatpush2.msra.mxu0 0.0
  %1114 = vmatprep.subr.mxu0 0.0
  %1115 = vmatpush2.msra.mxu0 0.0
  %1116 = vmatprep.subr.mxu0 0.0
  %1117 = vmatpush2.msra.mxu0 0.0
  %1118 = vmatprep.subr.mxu0 0.0
  %1119 = vmatpush2.msra.mxu0 0.0
  %1120 = vmatprep.subr.mxu0 0.0
  %1121 = vmatpush2.msra.mxu0 0.0
  %1122 = vmatprep.subr.mxu0 0.0
  %1123 = vmatpush2.msra.mxu0 0.0
  %1124 = vmatprep.subr.mxu0 0.0
  %1125 = vmatpush2.msra.mxu0 0.0
  %1126 = vmatprep.subr.mxu0 0.0
  %1127 = vmatpush2.msra.mxu0 0.0
  %1128 = vmatprep.subr.mxu0 0.0
  %1129 = vmatpush2.msra.mxu0 0.0
  %1130 = vmatprep.subr.mxu0 0.0
  %1131 = vmatpush2.msra.mxu0 0.0
  %1132 = vmatprep.subr.mxu0 0.0
  %1133 = vmatpush2.msra.mxu0 0.0
  %1134 = vmatprep.subr.mxu0 0.0
  %1135 = vmatpush2.msra.mxu0 0.0
  %1136 = vmatprep.mubr.f32.mxu0 0.0
  %1137 = vmatmul.mubr.f32.gmra.mxu0 %v928
  %v1138 = vpop.f32.mrf.mxu0
  %v1139 = vadd.f32 %v925, %v1138
  %v1140 = vpop.f32.mrf.mxu0
  %v1141 = vadd.f32 %v925, %v1140
  %1142 = vdwg.mxu0
  %1143 = vmatprep.subr.mxu0 0.0
  %1144 = vmatpush1.msra.mxu0 0.0
  %1145 = vmatprep.subr.mxu0 0.0
  %1146 = vmatpush1.msra.mxu0 0.0
  %1147 = vmatprep.subr.mxu0 0.0
  %1148 = vmatpush1.msra.mxu0 0.0
  %1149 = vmatprep.subr.mxu0 0.0
  %1150 = vmatpush1.msra.mxu0 0.0
  %1151 = vmatprep.subr.mxu0 0.0
  %1152 = vmatpush1.msra.mxu0 0.0
  %1153 = vmatprep.subr.mxu0 0.0
  %1154 = vmatpush1.msra.mxu0 0.0
  %1155 = vmatprep.subr.mxu0 0.0
  %1156 = vmatpush1.msra.mxu0 0.0
  %1157 = vmatprep.subr.mxu0 0.0
  %1158 = vmatpush1.msra.mxu0 0.0
  %1159 = vmatprep.subr.mxu0 0.0
  %1160 = vmatpush1.msra.mxu0 0.0
  %1161 = vmatprep.subr.mxu0 0.0
  %1162 = vmatpush1.msra.mxu0 0.0
  %1163 = vmatprep.subr.mxu0 0.0
  %1164 = vmatpush1.msra.mxu0 0.0
  %1165 = vmatprep.subr.mxu0 0.0
  %1166 = vmatpush1.msra.mxu0 0.0
  %1167 = vmatprep.subr.mxu0 %v919
  %1168 = vmatpush1.msra.mxu0 %v918
  %1169 = vmatprep.subr.mxu0 %v911
  %1170 = vmatpush1.msra.mxu0 %v910
  %1171 = vmatprep.subr.mxu0 %v903
  %1172 = vmatpush1.msra.mxu0 %v902
  %1173 = vmatprep.subr.mxu0 %v895
  %1174 = vmatpush1.msra.mxu0 %v894
  %1175 = vmatprep.subr.mxu0 0.0
  %1176 = vmatpush2.msra.mxu0 0.0
  %1177 = vmatprep.subr.mxu0 0.0
  %1178 = vmatpush2.msra.mxu0 0.0
  %1179 = vmatprep.subr.mxu0 0.0
  %1180 = vmatpush2.msra.mxu0 0.0
  %1181 = vmatprep.subr.mxu0 0.0
  %1182 = vmatpush2.msra.mxu0 0.0
  %1183 = vmatprep.subr.mxu0 0.0
  %1184 = vmatpush2.msra.mxu0 0.0
  %1185 = vmatprep.subr.mxu0 0.0
  %1186 = vmatpush2.msra.mxu0 0.0
  %1187 = vmatprep.subr.mxu0 0.0
  %1188 = vmatpush2.msra.mxu0 0.0
  %1189 = vmatprep.subr.mxu0 0.0
  %1190 = vmatpush2.msra.mxu0 0.0
  %1191 = vmatprep.subr.mxu0 0.0
  %1192 = vmatpush2.msra.mxu0 0.0
  %1193 = vmatprep.subr.mxu0 0.0
  %1194 = vmatpush2.msra.mxu0 0.0
  %1195 = vmatprep.subr.mxu0 0.0
  %1196 = vmatpush2.msra.mxu0 0.0
  %1197 = vmatprep.subr.mxu0 0.0
  %1198 = vmatpush2.msra.mxu0 0.0
  %1199 = vmatprep.subr.mxu0 0.0
  %1200 = vmatpush2.msra.mxu0 0.0
  %1201 = vmatprep.subr.mxu0 0.0
  %1202 = vmatpush2.msra.mxu0 0.0
  %1203 = vmatprep.subr.mxu0 0.0
  %1204 = vmatpush2.msra.mxu0 0.0
  %1205 = vmatprep.subr.mxu0 0.0
  %1206 = vmatpush2.msra.mxu0 0.0
  %1207 = vmatprep.mubr.f32.mxu0 0.0
  %1208 = vmatmul.mubr.f32.gmra.mxu0 %v928
  %v1209 = vpop.f32.mrf.mxu0
  %v1210 = vadd.f32 %v925, %v1209
  %v1211 = vpop.f32.mrf.mxu0
  %v1212 = vadd.f32 %v925, %v1211
  %1213 = vdwg.mxu0
  // Predicated region
  $region54: #{latent_encoder_forward.1} parent=0 // pred_check
    %p1214 = pneg %p41
  $region55: #{latent_encoder_forward.1} parent=0 // pred_check_branch
    %1216 = sbr.rel (%p1214) target = $region57
  $region56: #{latent_encoder_forward.1} parent=0 // pred_region
    %s1217 = smul.u32 0, 1024
    %v1218 = vlaneseq
    %v1219 = vand.u32 %v1218, 127
    %v1220 = vadd.s32 %v1219, 128
    %v1221 = vadd.s32 %v1219, 256
    %v1222 = vadd.s32 %v1219, 384
    %v1223 = vadd.s32 %v1219, 512
    %v1224 = vadd.s32 %v1219, 640
    %v1225 = vadd.s32 %v1219, 768
    %v1226 = vadd.s32 %v1219, 896
    %v1227 = vstv %s1217
    %v1228 = vadd.s32 %v1227, %v1219
    %v1229 = vadd.s32 %v1227, %v1220
    %v1230 = vadd.s32 %v1227, %v1221
    %v1231 = vadd.s32 %v1227, %v1222
    %v1232 = vadd.s32 %v1227, %v1223
    %v1233 = vadd.s32 %v1227, %v1224
    %v1234 = vadd.s32 %v1227, %v1225
    %v1235 = vadd.s32 %v1227, %v1226
    %v1236 = vld [vmem:[#allocation2] sm:$0xff]
    %v1237 = vld [vmem:[#allocation2 + $0x8] sm:$0xff]
    %v1238 = vld [vmem:[#allocation2 + $0x10] sm:$0xff]
    %v1239 = vld [vmem:[#allocation2 + $0x18] sm:$0xff]
    %v1240 = vld [vmem:[#allocation2 + $0x20] sm:$0xff]
    %v1241 = vld [vmem:[#allocation2 + $0x28] sm:$0xff]
    %v1242 = vld [vmem:[#allocation2 + $0x30] sm:$0xff]
    %v1243 = vld [vmem:[#allocation2 + $0x38] sm:$0xff]
    %vm1244 = vcmp.lt.s32.totalorder %v1228, 1000
    %vm1245 = vcmp.lt.s32.totalorder %v1229, 1000
    %vm1246 = vcmp.lt.s32.totalorder %v1230, 1000
    %vm1247 = vcmp.lt.s32.totalorder %v1231, 1000
    %vm1248 = vcmp.lt.s32.totalorder %v1232, 1000
    %vm1249 = vcmp.lt.s32.totalorder %v1233, 1000
    %vm1250 = vcmp.lt.s32.totalorder %v1234, 1000
    %vm1251 = vcmp.lt.s32.totalorder %v1235, 1000
    %v1252 = vsel %vm1244, %v997, 0.0
    %v1253 = vsel %vm1245, %v999, 0.0
    %v1254 = vsel %vm1246, %v1068, 0.0
    %v1255 = vsel %vm1247, %v1070, 0.0
    %v1256 = vsel %vm1248, %v1139, 0.0
    %v1257 = vsel %vm1249, %v1141, 0.0
    %v1258 = vsel %vm1250, %v1210, 0.0
    %v1259 = vsel %vm1251, %v1212, 0.0
    %v1260 = vadd.f32 %v1236, %v1252
    %v1261 = vadd.f32 %v1237, %v1253
    %v1262 = vadd.f32 %v1238, %v1254
    %v1263 = vadd.f32 %v1239, %v1255
    %v1264 = vadd.f32 %v1240, %v1256
    %v1265 = vadd.f32 %v1241, %v1257
    %v1266 = vadd.f32 %v1242, %v1258
    %v1267 = vadd.f32 %v1243, %v1259
    %1268 = vst [vmem:[#allocation2] sm:$0xff] %v1260
    %1269 = vst [vmem:[#allocation2 + $0x8] sm:$0xff] %v1261
    %1270 = vst [vmem:[#allocation2 + $0x10] sm:$0xff] %v1262
    %1271 = vst [vmem:[#allocation2 + $0x18] sm:$0xff] %v1263
    %1272 = vst [vmem:[#allocation2 + $0x20] sm:$0xff] %v1264
    %1273 = vst [vmem:[#allocation2 + $0x28] sm:$0xff] %v1265
    %1274 = vst [vmem:[#allocation2 + $0x30] sm:$0xff] %v1266
    %1275 = vst [vmem:[#allocation2 + $0x38] sm:$0xff] %v1267
  $region57: #{latent_encoder_forward.1} parent=0 // pred_fallthru
    _
  %p1276 = scmp.ne.s32.totalorder 0, 0
  // Predicated region
  $region58: #{latent_encoder_forward.1} parent=0 // pred_check
    %p1277 = pneg %p1276
  $region59: #{latent_encoder_forward.1} parent=0 // pred_check_branch
    %1279 = sbr.rel (%p1277) target = $region61
  $region60: #{latent_encoder_forward.1} parent=0 // pred_region
    %v1280 = vld [vmem:[#allocation2] sm:$0xff]
    %v1281 = vld [vmem:[#allocation2 + $0x8] sm:$0xff]
    %v1282 = vld [vmem:[#allocation2 + $0x10] sm:$0xff]
    %v1283 = vld [vmem:[#allocation2 + $0x18] sm:$0xff]
    %v1284 = vld [vmem:[#allocation2 + $0x20] sm:$0xff]
    %v1285 = vld [vmem:[#allocation2 + $0x28] sm:$0xff]
    %v1286 = vld [vmem:[#allocation2 + $0x30] sm:$0xff]
    %v1287 = vld [vmem:[#allocation2 + $0x38] sm:$0xff]
    %v1288 = vadd.f32 %v1280, %v997
    %v1289 = vadd.f32 %v1281, %v999
    %v1290 = vadd.f32 %v1282, %v1068
    %v1291 = vadd.f32 %v1283, %v1070
    %v1292 = vadd.f32 %v1284, %v1139
    %v1293 = vadd.f32 %v1285, %v1141
    %v1294 = vadd.f32 %v1286, %v1210
    %v1295 = vadd.f32 %v1287, %v1212
    %1296 = vst [vmem:[#allocation2] sm:$0xff] %v1288
    %1297 = vst [vmem:[#allocation2 + $0x8] sm:$0xff] %v1289
    %1298 = vst [vmem:[#allocation2 + $0x10] sm:$0xff] %v1290
    %1299 = vst [vmem:[#allocation2 + $0x18] sm:$0xff] %v1291
    %1300 = vst [vmem:[#allocation2 + $0x20] sm:$0xff] %v1292
    %1301 = vst [vmem:[#allocation2 + $0x28] sm:$0xff] %v1293
    %1302 = vst [vmem:[#allocation2 + $0x30] sm:$0xff] %v1294
    %1303 = vst [vmem:[#allocation2 + $0x38] sm:$0xff] %v1295
  $region61: #{latent_encoder_forward.1} parent=0 // pred_fallthru
    _
  // Predicated region
  $region62: #{latent_encoder_forward.1} parent=0 // pred_check
    %p1304 = pneg %p41
  $region63: #{latent_encoder_forward.1} parent=0 // pred_check_branch
    %1306 = sbr.rel (%p1304) target = $region65
  $region64: #{latent_encoder_forward.1} parent=0 // pred_region
    %v1307 = vld [vmem:[#allocation2] sm:$0xff]
    %v1308 = vld [vmem:[#allocation2 + $0x8] sm:$0xff]
    %v1309 = vld [vmem:[#allocation2 + $0x10] sm:$0xff]
    %v1310 = vld [vmem:[#allocation2 + $0x18] sm:$0xff]
    %v1311 = vld [vmem:[#allocation2 + $0x20] sm:$0xff]
    %v1312 = vld [vmem:[#allocation2 + $0x28] sm:$0xff]
    %v1313 = vld [vmem:[#allocation2 + $0x30] sm:$0xff]
    %v1314 = vld [vmem:[#allocation2 + $0x38] sm:$0xff]
    %v1315 = vadd.f32 %v1307, %v1308
    %v1316 = vadd.f32 %v1315, %v1309
    %v1317 = vadd.f32 %v1316, %v1310
    %v1318 = vadd.f32 %v1317, %v1311
    %v1319 = vadd.f32 %v1318, %v1312
    %v1320 = vadd.f32 %v1319, %v1313
    %v1321 = vadd.f32 %v1320, %v1314
    %1322 = vadd.xlane.f32.xlu0 %v1321
    %v1323 = vpop.xlane.xlu0 %1322
    %v1324 = vmul.f32 %v1323, 0.001
    %v1325 = vld [vmem:[%s6] sm:$0xff]
    %v1326 = vld [vmem:[%s7] sm:$0xff]
    %vm1327 = vcmask 64512
    %v1329 = vsel %vm1327, %v1325, 0
    %1331 = vmatprep.subr.mxu0 0.0
    %1332 = vmatpush1.msra.mxu0 0.0
    %1333 = vmatprep.subr.mxu0 0.0
    %1334 = vmatpush1.msra.mxu0 0.0
    %1335 = vmatprep.subr.mxu0 0.0
    %1336 = vmatpush1.msra.mxu0 0.0
    %1337 = vmatprep.subr.mxu0 0.0
    %1338 = vmatpush1.msra.mxu0 0.0
    %1339 = vmatprep.subr.mxu0 0.0
    %1340 = vmatpush1.msra.mxu0 0.0
    %1341 = vmatprep.subr.mxu0 0.0
    %1342 = vmatpush1.msra.mxu0 0.0
    %1343 = vmatprep.subr.mxu0 0.0
    %1344 = vmatpush1.msra.mxu0 0.0
    %1345 = vmatprep.subr.mxu0 0.0
    %1346 = vmatpush1.msra.mxu0 0.0
    %1347 = vmatprep.subr.mxu0 0.0
    %1348 = vmatpush1.msra.mxu0 0.0
    %1349 = vmatprep.subr.mxu0 0.0
    %1350 = vmatpush1.msra.mxu0 0.0
    %1351 = vmatprep.subr.mxu0 0.0
    %1352 = vmatpush1.msra.mxu0 0.0
    %1353 = vmatprep.subr.mxu0 0.0
    %1354 = vmatpush1.msra.mxu0 0.0
    %1355 = vmatprep.subr.mxu0 0.0
    %1356 = vmatpush1.msra.mxu0 0.0
    %1357 = vmatprep.subr.mxu0 0.0
    %1358 = vmatpush1.msra.mxu0 0.0
    %1359 = vmatprep.subr.mxu0 0.0
    %1360 = vmatpush1.msra.mxu0 0.0
    %1361 = vmatprep.subr.mxu0 0.0
    %1362 = vmatpush1.msra.mxu0 %v1324
    %1363 = vmatprep.subr.mxu0 0.0
    %1364 = vmatpush2.msra.mxu0 0.0
    %1365 = vmatprep.subr.mxu0 0.0
    %1366 = vmatpush2.msra.mxu0 0.0
    %1367 = vmatprep.subr.mxu0 0.0
    %1368 = vmatpush2.msra.mxu0 0.0
    %1369 = vmatprep.subr.mxu0 0.0
    %1370 = vmatpush2.msra.mxu0 0.0
    %1371 = vmatprep.subr.mxu0 0.0
    %1372 = vmatpush2.msra.mxu0 0.0
    %1373 = vmatprep.subr.mxu0 0.0
    %1374 = vmatpush2.msra.mxu0 0.0
    %1375 = vmatprep.subr.mxu0 0.0
    %1376 = vmatpush2.msra.mxu0 0.0
    %1377 = vmatprep.subr.mxu0 0.0
    %1378 = vmatpush2.msra.mxu0 0.0
    %1379 = vmatprep.subr.mxu0 0.0
    %1380 = vmatpush2.msra.mxu0 0.0
    %1381 = vmatprep.subr.mxu0 0.0
    %1382 = vmatpush2.msra.mxu0 0.0
    %1383 = vmatprep.subr.mxu0 0.0
    %1384 = vmatpush2.msra.mxu0 0.0
    %1385 = vmatprep.subr.mxu0 0.0
    %1386 = vmatpush2.msra.mxu0 0.0
    %1387 = vmatprep.subr.mxu0 0.0
    %1388 = vmatpush2.msra.mxu0 0.0
    %1389 = vmatprep.subr.mxu0 0.0
    %1390 = vmatpush2.msra.mxu0 0.0
    %1391 = vmatprep.subr.mxu0 0.0
    %1392 = vmatpush2.msra.mxu0 0.0
    %1393 = vmatprep.subr.mxu0 0.0
    %1394 = vmatpush2.msra.mxu0 0.0
    %1395 = vmatprep.mubr.f32.mxu0 0.0
    %1396 = vmatmul.mubr.f32.gmra.mxu0 %v1329
    %v1397 = vpop.f32.mrf.mxu0
    %v1398 = vadd.f32 %v1326, %v1397
    %v1399 = vpop.f32.mrf.mxu0
    %1400 = vdwg.mxu0
    %v1401 = vmax.f32 %v1398, 0.0
    %v1402 = vld [vmem:[%s8] sm:$0xff]
    %v1403 = vld [vmem:[%s9] sm:$0xff]
    %v1405 = vsel %vm1327, %v1402, 0
    %1407 = vmatprep.subr.mxu0 0.0
    %1408 = vmatpush1.msra.mxu0 0.0
    %1409 = vmatprep.subr.mxu0 0.0
    %1410 = vmatpush1.msra.mxu0 0.0
    %1411 = vmatprep.subr.mxu0 0.0
    %1412 = vmatpush1.msra.mxu0 0.0
    %1413 = vmatprep.subr.mxu0 0.0
    %1414 = vmatpush1.msra.mxu0 0.0
    %1415 = vmatprep.subr.mxu0 0.0
    %1416 = vmatpush1.msra.mxu0 0.0
    %1417 = vmatprep.subr.mxu0 0.0
    %1418 = vmatpush1.msra.mxu0 0.0
    %1419 = vmatprep.subr.mxu0 0.0
    %1420 = vmatpush1.msra.mxu0 0.0
    %1421 = vmatprep.subr.mxu0 0.0
    %1422 = vmatpush1.msra.mxu0 0.0
    %1423 = vmatprep.subr.mxu0 0.0
    %1424 = vmatpush1.msra.mxu0 0.0
    %1425 = vmatprep.subr.mxu0 0.0
    %1426 = vmatpush1.msra.mxu0 0.0
    %1427 = vmatprep.subr.mxu0 0.0
    %1428 = vmatpush1.msra.mxu0 0.0
    %1429 = vmatprep.subr.mxu0 0.0
    %1430 = vmatpush1.msra.mxu0 0.0
    %1431 = vmatprep.subr.mxu0 0.0
    %1432 = vmatpush1.msra.mxu0 0.0
    %1433 = vmatprep.subr.mxu0 0.0
    %1434 = vmatpush1.msra.mxu0 0.0
    %1435 = vmatprep.subr.mxu0 0.0
    %1436 = vmatpush1.msra.mxu0 0.0
    %1437 = vmatprep.subr.mxu0 0.0
    %1438 = vmatpush1.msra.mxu0 %v1401
    %1439 = vmatprep.subr.mxu0 0.0
    %1440 = vmatpush2.msra.mxu0 0.0
    %1441 = vmatprep.subr.mxu0 0.0
    %1442 = vmatpush2.msra.mxu0 0.0
    %1443 = vmatprep.subr.mxu0 0.0
    %1444 = vmatpush2.msra.mxu0 0.0
    %1445 = vmatprep.subr.mxu0 0.0
    %1446 = vmatpush2.msra.mxu0 0.0
    %1447 = vmatprep.subr.mxu0 0.0
    %1448 = vmatpush2.msra.mxu0 0.0
    %1449 = vmatprep.subr.mxu0 0.0
    %1450 = vmatpush2.msra.mxu0 0.0
    %1451 = vmatprep.subr.mxu0 0.0
    %1452 = vmatpush2.msra.mxu0 0.0
    %1453 = vmatprep.subr.mxu0 0.0
    %1454 = vmatpush2.msra.mxu0 0.0
    %1455 = vmatprep.subr.mxu0 0.0
    %1456 = vmatpush2.msra.mxu0 0.0
    %1457 = vmatprep.subr.mxu0 0.0
    %1458 = vmatpush2.msra.mxu0 0.0
    %1459 = vmatprep.subr.mxu0 0.0
    %1460 = vmatpush2.msra.mxu0 0.0
    %1461 = vmatprep.subr.mxu0 0.0
    %1462 = vmatpush2.msra.mxu0 0.0
    %1463 = vmatprep.subr.mxu0 0.0
    %1464 = vmatpush2.msra.mxu0 0.0
    %1465 = vmatprep.subr.mxu0 0.0
    %1466 = vmatpush2.msra.mxu0 0.0
    %1467 = vmatprep.subr.mxu0 0.0
    %1468 = vmatpush2.msra.mxu0 0.0
    %1469 = vmatprep.subr.mxu0 0.0
    %1470 = vmatpush2.msra.mxu0 0.0
    %1471 = vmatprep.mubr.f32.mxu0 0.0
    %1472 = vmatmul.mubr.f32.gmra.mxu0 %v1405
    %v1473 = vpop.f32.mrf.mxu0
    %v1474 = vadd.f32 %v1403, %v1473
    %v1475 = vpop.f32.mrf.mxu0
    %1476 = vdwg.mxu0
    %v1477 = vld [vmem:[%s10] sm:$0xff]
    %v1478 = vld [vmem:[%s11] sm:$0xff]
    %v1480 = vsel %vm1327, %v1477, 0
    %1482 = vmatprep.subr.mxu0 0.0
    %1483 = vmatpush1.msra.mxu0 0.0
    %1484 = vmatprep.subr.mxu0 0.0
    %1485 = vmatpush1.msra.mxu0 0.0
    %1486 = vmatprep.subr.mxu0 0.0
    %1487 = vmatpush1.msra.mxu0 0.0
    %1488 = vmatprep.subr.mxu0 0.0
    %1489 = vmatpush1.msra.mxu0 0.0
    %1490 = vmatprep.subr.mxu0 0.0
    %1491 = vmatpush1.msra.mxu0 0.0
    %1492 = vmatprep.subr.mxu0 0.0
    %1493 = vmatpush1.msra.mxu0 0.0
    %1494 = vmatprep.subr.mxu0 0.0
    %1495 = vmatpush1.msra.mxu0 0.0
    %1496 = vmatprep.subr.mxu0 0.0
    %1497 = vmatpush1.msra.mxu0 0.0
    %1498 = vmatprep.subr.mxu0 0.0
    %1499 = vmatpush1.msra.mxu0 0.0
    %1500 = vmatprep.subr.mxu0 0.0
    %1501 = vmatpush1.msra.mxu0 0.0
    %1502 = vmatprep.subr.mxu0 0.0
    %1503 = vmatpush1.msra.mxu0 0.0
    %1504 = vmatprep.subr.mxu0 0.0
    %1505 = vmatpush1.msra.mxu0 0.0
    %1506 = vmatprep.subr.mxu0 0.0
    %1507 = vmatpush1.msra.mxu0 0.0
    %1508 = vmatprep.subr.mxu0 0.0
    %1509 = vmatpush1.msra.mxu0 0.0
    %1510 = vmatprep.subr.mxu0 0.0
    %1511 = vmatpush1.msra.mxu0 0.0
    %1512 = vmatprep.subr.mxu0 0.0
    %1513 = vmatpush1.msra.mxu0 %v1401
    %1514 = vmatprep.subr.mxu0 0.0
    %1515 = vmatpush2.msra.mxu0 0.0
    %1516 = vmatprep.subr.mxu0 0.0
    %1517 = vmatpush2.msra.mxu0 0.0
    %1518 = vmatprep.subr.mxu0 0.0
    %1519 = vmatpush2.msra.mxu0 0.0
    %1520 = vmatprep.subr.mxu0 0.0
    %1521 = vmatpush2.msra.mxu0 0.0
    %1522 = vmatprep.subr.mxu0 0.0
    %1523 = vmatpush2.msra.mxu0 0.0
    %1524 = vmatprep.subr.mxu0 0.0
    %1525 = vmatpush2.msra.mxu0 0.0
    %1526 = vmatprep.subr.mxu0 0.0
    %1527 = vmatpush2.msra.mxu0 0.0
    %1528 = vmatprep.subr.mxu0 0.0
    %1529 = vmatpush2.msra.mxu0 0.0
    %1530 = vmatprep.subr.mxu0 0.0
    %1531 = vmatpush2.msra.mxu0 0.0
    %1532 = vmatprep.subr.mxu0 0.0
    %1533 = vmatpush2.msra.mxu0 0.0
    %1534 = vmatprep.subr.mxu0 0.0
    %1535 = vmatpush2.msra.mxu0 0.0
    %1536 = vmatprep.subr.mxu0 0.0
    %1537 = vmatpush2.msra.mxu0 0.0
    %1538 = vmatprep.subr.mxu0 0.0
    %1539 = vmatpush2.msra.mxu0 0.0
    %1540 = vmatprep.subr.mxu0 0.0
    %1541 = vmatpush2.msra.mxu0 0.0
    %1542 = vmatprep.subr.mxu0 0.0
    %1543 = vmatpush2.msra.mxu0 0.0
    %1544 = vmatprep.subr.mxu0 0.0
    %1545 = vmatpush2.msra.mxu0 0.0
    %1546 = vmatprep.mubr.f32.mxu0 0.0
    %1547 = vmatmul.mubr.f32.gmra.mxu0 %v1480
    %v1548 = vpop.f32.mrf.mxu0
    %v1549 = vadd.f32 %v1478, %v1548
    %v1550 = vpop.f32.mrf.mxu0
    %1551 = vdwg.mxu0
    %v1552 = vxor.u32 %v1549, 2147483648
    %v1553 = vmul.f32 %v1552, 1.442695
    %v1554 = vpow.pop %v1553
    %v1555 = vadd.f32 %v1554, 1.0
    %v1556 = vrcp.pop %v1555
    %v1557 = vmul.f32 1.0, %v1556
    %v1558 = vmul.f32 %v1557, 0.9
    %v1559 = vadd.f32 %v1558, 0.1
    %1561 = vrot.lane.b32.xlu0 %v1559, 1
    %v1562 = vpop.permute.xlu0 %1561
    %vm1564 = vcmask 7168
    %v1565 = vsel %vm1564, %v1474, %v1562
    %vm1566 = vcmask 15360
    %1567 = vst.msk [vmem:[%s12] sm:$0xff] %vm1566, %v1565
  $region65: #{latent_encoder_forward.1} parent=0 // pred_fallthru
    _
  // Predicated region
  $region66: #{latent_encoder_forward.1} parent=0 // pred_check
    _
  $region67: #{latent_encoder_forward.1} parent=0 // pred_check_branch
    %1569 = sbr.rel (0) target = $region69
  $region68: #{latent_encoder_forward.1} parent=0 // pred_region
    _
  $region69: #{latent_encoder_forward.1} parent=0 // pred_fallthru
    _
  // Predicated region
  $region70: #{latent_encoder_forward.1} parent=0 // pred_check
    _
  $region71: #{latent_encoder_forward.1} parent=0 // pred_check_branch
    %1571 = sbr.rel (0) target = $region73
  $region72: #{latent_encoder_forward.1} parent=0 // pred_region
    _
  $region73: #{latent_encoder_forward.1} parent=0 // pred_fallthru
    _

</llo_original>
